<compile_context>
chip_gen: v7x
topology: tpu7x:2x2x1
jax: 0.10.0
libtpu: 0.0.40
codegen_flags: <defaults>
</compile_context>

<pallas_src>
import jax
import jax.numpy as jnp
from jax.experimental import pallas as pl
from jax.experimental.pallas import tpu as pltpu

C_HID = 64    # conv channels
C_FC1 = 50    # true fc1 width
C_PAD = 64    # lane-padded fc1/fc2 width (zero columns are inert)


# ---------------------------------------------------------------------------
# Kernel
# ---------------------------------------------------------------------------
def tcn_kernel(x_ref, w1_ref, b1_ref, w2_ref, b2_ref,
               fw1_ref, fb1_ref, fw2_ref, fb2_ref, out_ref):
    Bt, L, Cin = x_ref.shape
    n = Bt * L
    bf = jnp.bfloat16

    # Sequence position of every flattened (batch, time) row.  The masks zero
    # exactly the rows whose rolled value wrapped across a sequence (or block)
    # boundary, so a plain rank-2 sublane rotate implements the zero-padded
    # dilated taps of Conv1d(kernel_size=3, padding=2, dilation=2).
    row = jax.lax.broadcasted_iota(jnp.int32, (n, 1), 0)
    t = row % L
    ok_m2 = t >= 2           # tap h[t-2] exists
    ok_p2 = t < L - 2        # tap h[t+2] exists

    def im2col(h):           # h: (Bt*L, C) f32 -> (Bt*L, 3C) bf16
        h_m2 = jnp.where(ok_m2, pltpu.roll(h, 2, axis=0), 0.0)      # h[t-2]
        h_p2 = jnp.where(ok_p2, pltpu.roll(h, n - 2, axis=0), 0.0)   # h[t+2]
        return jnp.concatenate(
            [h_m2.astype(bf), h.astype(bf), h_p2.astype(bf)], axis=-1)

    # ---- conv1 + relu: in-kernel im2col, one (Bt*L, 3*Cin) MXU matmul -----
    x = x_ref[...].reshape(n, Cin)                                  # f32
    h1 = jnp.dot(im2col(x), w1_ref[...], preferred_element_type=jnp.float32)
    h1 = jnp.maximum(h1 + b1_ref[...], 0.0)                         # (n, 64) f32

    # ---- conv2 + relu: im2col from registers, single K=192 matmul ---------
    # TODO(synk): for very long L, add an inner time tile (2-step halo) and
    # accumulate the pooled sum in VMEM scratch to stay under v7x's 64 MiB/TC.
    h2 = jnp.dot(im2col(h1), w2_ref[...], preferred_element_type=jnp.float32)
    h2 = jnp.maximum(h2 + b2_ref[...], 0.0)                         # (n, 64) f32

    # ---- mean pool over time, fc1 + relu -----------------------------------
    pooled = jnp.sum(h2.reshape(Bt, L, C_HID), axis=1) * (1.0 / L)  # (Bt, 64)
    z = jnp.dot(pooled.astype(bf), fw1_ref[...],
                preferred_element_type=jnp.float32)
    z = jnp.maximum(z + fb1_ref[...], 0.0)                          # (Bt, 64) padded

    # ---- fc2 (out_features=1) on the VPU: multiply + lane reduce -----------
    out = jnp.sum(z * fw2_ref[...], axis=-1, keepdims=True) + fb2_ref[...]
    out_ref[...] = out.astype(out_ref.dtype)


# ---------------------------------------------------------------------------
# Wrapper
# ---------------------------------------------------------------------------
def _vmem_limit_bytes():
    """Per-generation VMEM budget: ~3/4 of physical, capped at 64 MiB
    (=> ~48 MiB on v7x's 64 MiB/TC, 64 MiB on v5e/v6e's 128 MiB)."""
    cap = 128 * 1024 * 1024
    try:
        info = pltpu.get_tpu_info()
        cap = int(getattr(info, "vmem_capacity_bytes", cap))
    except Exception:
        pass
    return min(64 * 1024 * 1024, (cap * 3) // 4)


def _pick_block_b(b_padded, L, vmem_budget):
    """Largest multiple-of-8 divisor of b_padded whose per-step intermediates
    fit in ~half the VMEM budget (rest: pipeline buffers + headroom)."""
    bytes_per_row = (
        2 * C_HID * 4        # h1, h2 (f32)
        + 2 * C_HID * 4      # rolled f32 taps for conv2
        + 3 * C_HID * 2      # conv2 im2col (bf16)
        + 8 * 32             # conv1 input / taps / masks (over-estimate)
    )
    cap = max(8, (vmem_budget // 2) // (L * bytes_per_row))
    cap = min(256, int(cap))
    best = 8
    for d in range(8, min(b_padded, cap) + 1, 8):
        if b_padded % d == 0:
            best = d
    return best


def tcn_forward(x, packed_params, *, block_b=None):
    """x: (B, L, C_in) float32, L % 8 == 0. packed_params from pack_params()."""
    w1c, b1, w2c, b2, fw1p, fb1p, fw2p, fb2 = packed_params
    B, L, Cin = x.shape
    if L % 8 != 0:
        # TODO(synk): pad/mask the time axis to support L not a multiple of 8.
        raise ValueError(f"L={L} must be a multiple of 8 (sublane tile).")

    vmem_limit = _vmem_limit_bytes()

    if block_b is None:
        b_padded = ((B + 7) // 8) * 8
        block_b = _pick_block_b(b_padded, L, vmem_limit)
    else:
        if block_b % 8 != 0:
            raise ValueError(f"block_b={block_b} must be a multiple of 8.")
        b_padded = ((B + block_b - 1) // block_b) * block_b

    if b_padded != B:                      # pad instead of dropping rows
        x = jnp.pad(x, ((0, b_padded - B), (0, 0), (0, 0)))

    grid = (b_padded // block_b,)

    def const_spec(a):                     # weights stay resident across steps
        return pl.BlockSpec(a.shape, lambda i, n=a.ndim: (0,) * n)

    out = pl.pallas_call(
        tcn_kernel,
        out_shape=jax.ShapeDtypeStruct((b_padded, 1), jnp.float32),
        grid=grid,
        in_specs=[
            pl.BlockSpec((block_b, L, Cin), lambda i: (i, 0, 0)),
            const_spec(w1c), const_spec(b1),
            const_spec(w2c), const_spec(b2),
            const_spec(fw1p), const_spec(fb1p),
            const_spec(fw2p), const_spec(fb2),
        ],
        out_specs=pl.BlockSpec((block_b, 1), lambda i: (i, 0)),
        compiler_params=pltpu.CompilerParams(
            dimension_semantics=("parallel",),
            vmem_limit_bytes=vmem_limit,
        ),
    )(x, w1c, b1, w2c, b2, fw1p, fb1p, fw2p, fb2)
    return out[:B]


# ---------------------------------------------------------------------------
# Parameters
# ---------------------------------------------------------------------------
def make_params(key, input_size):
    """Raw parameters; conv weights stored as (K=3, C_in, C_out)."""
    ks = jax.random.split(key, 8)
    s = 0.1
    w1 = jax.random.normal(ks[0], (3, input_size, C_HID), jnp.float32) * s
    b1 = jax.random.normal(ks[1], (1, C_HID), jnp.float32) * s
    w2 = jax.random.normal(ks[2], (3, C_HID, C_HID), jnp.float32) * s
    b2 = jax.random.normal(ks[3], (1, C_HID), jnp.float32) * s
    fw1 = jax.random.normal(ks[4], (C_HID, C_FC1), jnp.float32) * s
    fb1 = jax.random.normal(ks[5], (1, C_FC1), jnp.float32) * s
    fw2 = jax.random.normal(ks[6], (C_FC1, 1), jnp.float32) * s
    fb2 = jax.random.normal(ks[7], (1, 1), jnp.float32) * s
    return (w1, b1, w2, b2, fw1, fb1, fw2, fb2)


def pack_params(params):
    """Kernel layout: im2col-fused conv weights (bf16); fc1/fc2 zero-padded to
    64 lanes; fc2 transposed (1, 64) f32 for the VPU lane reduce."""
    w1, b1, w2, b2, fw1, fb1, fw2, fb2 = params
    cin = w1.shape[1]
    w1c = w1.reshape(3 * cin, C_HID).astype(jnp.bfloat16)          # (3*Cin, 64)
    w2c = w2.reshape(3 * C_HID, C_HID).astype(jnp.bfloat16)        # (192, 64)
    fw1p = jnp.zeros((C_HID, C_PAD), jnp.bfloat16).at[:, :C_FC1].set(
        fw1.astype(jnp.bfloat16))
    fb1p = jnp.zeros((1, C_PAD), jnp.float32).at[:, :C_FC1].set(fb1)
    fw2p = jnp.zeros((1, C_PAD), jnp.float32).at[:, :C_FC1].set(fw2.T)
    return (w1c, b1, w2c, b2, fw1p, fb1p, fw2p, fb2)


# ---------------------------------------------------------------------------
# References
# ---------------------------------------------------------------------------
def ref_forward_f32(x, params):
    """Pure f32 reference with exact PyTorch TCNModel forward semantics."""
    w1, b1, w2, b2, fw1, fb1, fw2, fb2 = params
    _, L, _ = x.shape

    def dconv(h, w, b):                     # Conv1d(k=3, padding=2, dilation=2)
        hp = jnp.pad(h, ((0, 0), (2, 2), (0, 0)))
        acc = sum(jnp.einsum("blc,cd->bld", hp[:, 2 * k:2 * k + L, :], w[k])
                  for k in range(3))
        return jax.nn.relu(acc + b)

    h2 = dconv(dconv(x, w1, b1), w2, b2)
    z = jax.nn.relu(h2.mean(axis=1) @ fw1 + fb1)
    return z @ fw2 + fb2


def ref_forward_mixed(x, params):
    """Mirrors the kernel's precision (bf16 matmul operands, f32 accumulate)."""
    w1, b1, w2, b2, fw1, fb1, fw2, fb2 = params
    _, L, _ = x.shape
    bf = jnp.bfloat16

    def dconv(h, w, b):
        hp = jnp.pad(h, ((0, 0), (2, 2), (0, 0)))
        taps = jnp.concatenate([hp[:, 2 * k:2 * k + L, :] for k in range(3)], -1)
        acc = jnp.einsum("blk,kc->blc", taps.astype(bf),
                         w.reshape(-1, w.shape[-1]).astype(bf),
                         preferred_element_type=jnp.float32)
        return jax.nn.relu(acc + b)

    h2 = dconv(dconv(x, w1, b1), w2, b2)
    pooled = h2.sum(axis=1) * (1.0 / L)
    z = jax.nn.relu(jnp.dot(pooled.astype(bf), fw1.astype(bf),
                            preferred_element_type=jnp.float32) + fb1)
    return jnp.sum(z * fw2.T, axis=-1, keepdims=True) + fb2


# ---------------------------------------------------------------------------
if __name__ == "__main__":
    key = jax.random.PRNGKey(0)
    k_x, k_p = jax.random.split(key)

    B, L, C_IN = 16, 16, 4                 # batch, sequence length, input_size
    x = jax.random.normal(k_x, (B, L, C_IN), jnp.float32)
    params = make_params(k_p, C_IN)
    packed = pack_params(params)

    out = jax.block_until_ready(tcn_forward(x, packed))              # auto tile
    out_b8 = jax.block_until_ready(tcn_forward(x, packed, block_b=8))  # grid=(2,)

    ref_mx = ref_forward_mixed(x, params)   # kernel-precision reference (tight)
    ref_32 = ref_forward_f32(x, params)     # true f32 PyTorch semantics (loose)

    assert out.shape == (B, 1)
    assert jnp.allclose(out, out_b8, atol=1e-5, rtol=1e-5), (out, out_b8)
    assert jnp.allclose(out, ref_mx, atol=5e-3, rtol=5e-3), (out, ref_mx)
    assert jnp.allclose(out, ref_32, atol=3e-2, rtol=3e-2), (out, ref_32)

    print("KERNEL_OK")
</pallas_src>

<mosaic_0001>
module attributes {stable_mosaic.version = 11 : i64} {
  func.func @tcn_kernel(%arg0: i32, %arg1: memref<16x16x4xf32, #tpu.memory_space<vmem>>, %arg2: memref<12x64xbf16, #tpu.memory_space<vmem>>, %arg3: memref<1x64xf32, #tpu.memory_space<vmem>>, %arg4: memref<192x64xbf16, #tpu.memory_space<vmem>>, %arg5: memref<1x64xf32, #tpu.memory_space<vmem>>, %arg6: memref<64x64xbf16, #tpu.memory_space<vmem>>, %arg7: memref<1x64xf32, #tpu.memory_space<vmem>>, %arg8: memref<1x64xf32, #tpu.memory_space<vmem>>, %arg9: memref<1x1xf32, #tpu.memory_space<vmem>>, %arg10: memref<16x1xf32, #tpu.memory_space<vmem>>) attributes {dimension_semantics = [#tpu.dimension_semantics<parallel>], iteration_bounds = array<i64: 1>, scalar_prefetch = 0 : i64, scratch_operands = 0 : i64, tpu.core_type = #tpu.core_type<tc>, window_params = [{transform_indices = @transform_0, window_bounds = array<i64: 16, 16, 4>}, {pipeline_mode = #tpu.pipeline_mode<synchronous>, transform_indices = @transform_1, window_bounds = array<i64: 12, 64>}, {pipeline_mode = #tpu.pipeline_mode<synchronous>, transform_indices = @transform_2, window_bounds = array<i64: 1, 64>}, {pipeline_mode = #tpu.pipeline_mode<synchronous>, transform_indices = @transform_3, window_bounds = array<i64: 192, 64>}, {pipeline_mode = #tpu.pipeline_mode<synchronous>, transform_indices = @transform_4, window_bounds = array<i64: 1, 64>}, {pipeline_mode = #tpu.pipeline_mode<synchronous>, transform_indices = @transform_5, window_bounds = array<i64: 64, 64>}, {pipeline_mode = #tpu.pipeline_mode<synchronous>, transform_indices = @transform_6, window_bounds = array<i64: 1, 64>}, {pipeline_mode = #tpu.pipeline_mode<synchronous>, transform_indices = @transform_7, window_bounds = array<i64: 1, 64>}, {pipeline_mode = #tpu.pipeline_mode<synchronous>, transform_indices = @transform_8, window_bounds = array<i64: 1, 1>}, {transform_indices = @transform_9, window_bounds = array<i64: 16, 1>}]} {
    %0 = tpu.iota {dimensions = array<i32: 0>} : vector<256x1xi32>
    %c16_i32 = arith.constant 16 : i32
    %c0_i32 = arith.constant 0 : i32
    %1 = arith.cmpi eq, %c16_i32, %c0_i32 : i32
    %c1_i32 = arith.constant 1 : i32
    %2 = arith.select %1, %c1_i32, %c16_i32 : i32
    %3 = vector.broadcast %2 : i32 to vector<256x1xi32>
    %4 = arith.remsi %0, %3 : vector<256x1xi32>
    %c0_i32_0 = arith.constant 0 : i32
    %5 = vector.broadcast %c0_i32_0 : i32 to vector<256x1xi32>
    %6 = arith.cmpi ne, %4, %5 : vector<256x1xi32>
    %c0_i32_1 = arith.constant 0 : i32
    %7 = vector.broadcast %c0_i32_1 : i32 to vector<256x1xi32>
    %8 = arith.cmpi slt, %4, %7 : vector<256x1xi32>
    %c0_i32_2 = arith.constant 0 : i32
    %9 = arith.cmpi slt, %2, %c0_i32_2 : i32
    %10 = vector.broadcast %9 : i1 to vector<256x1xi1>
    %11 = vector.broadcast %10 : vector<256x1xi1> to vector<256x1xi1>
    %12 = arith.xori %8, %11 : vector<256x1xi1>
    %13 = arith.andi %12, %6 : vector<256x1xi1>
    %14 = vector.broadcast %2 : i32 to vector<256x1xi32>
    %15 = arith.addi %4, %14 : vector<256x1xi32>
    %16 = arith.select %13, %15, %4 : vector<256x1xi1>, vector<256x1xi32>
    %c2_i32 = arith.constant 2 : i32
    %17 = vector.broadcast %c2_i32 : i32 to vector<256x1xi32>
    %18 = arith.cmpi sge, %16, %17 : vector<256x1xi32>
    %c14_i32 = arith.constant 14 : i32
    %19 = vector.broadcast %c14_i32 : i32 to vector<256x1xi32>
    %20 = arith.cmpi slt, %16, %19 : vector<256x1xi32>
    %c0 = arith.constant 0 : index
    %c0_3 = arith.constant 0 : index
    %c0_4 = arith.constant 0 : index
    %21 = vector.load %arg1[%c0, %c0_3, %c0_4] : memref<16x16x4xf32, #tpu.memory_space<vmem>>, vector<16x16x4xf32>
    %22 = vector.shape_cast %21 : vector<16x16x4xf32> to vector<256x4xf32>
    %c2_i32_5 = arith.constant 2 : i32
    %23 = tpu.dynamic_rotate %22 by %c2_i32_5 dim 0 : vector<256x4xf32>, i32 -> vector<256x4xf32>
    %cst = arith.constant 0.000000e+00 : f32
    %24 = vector.shape_cast %18 : vector<256x1xi1> to vector<256x1xi1>
    %25 = vector.broadcast %24 : vector<256x1xi1> to vector<256x4xi1>
    %26 = vector.broadcast %cst : f32 to vector<256x4xf32>
    %27 = arith.select %25, %23, %26 : vector<256x4xi1>, vector<256x4xf32>
    %c254_i32 = arith.constant 254 : i32
    %28 = tpu.dynamic_rotate %22 by %c254_i32 dim 0 : vector<256x4xf32>, i32 -> vector<256x4xf32>
    %cst_6 = arith.constant 0.000000e+00 : f32
    %29 = vector.shape_cast %20 : vector<256x1xi1> to vector<256x1xi1>
    %30 = vector.broadcast %29 : vector<256x1xi1> to vector<256x4xi1>
    %31 = vector.broadcast %cst_6 : f32 to vector<256x4xf32>
    %32 = arith.select %30, %28, %31 : vector<256x4xi1>, vector<256x4xf32>
    %33 = arith.truncf %27 : vector<256x4xf32> to vector<256x4xbf16>
    %34 = arith.truncf %22 : vector<256x4xf32> to vector<256x4xbf16>
    %35 = arith.truncf %32 : vector<256x4xf32> to vector<256x4xbf16>
    %36 = tpu.concatenate %33, %34, %35 in 1 : vector<256x4xbf16>, vector<256x4xbf16>, vector<256x4xbf16> -> vector<256x12xbf16>
    %c0_7 = arith.constant 0 : index
    %c0_8 = arith.constant 0 : index
    %37 = vector.load %arg2[%c0_7, %c0_8] : memref<12x64xbf16, #tpu.memory_space<vmem>>, vector<12x64xbf16>
    %cst_9 = arith.constant dense<0.000000e+00> : vector<256x64xf32>
    %38 = tpu.matmul %36, %37, %cst_9 {dimension_numbers = #tpu.dot_dimension_numbers<[1], [0], [0], [1], [0, 0, 1, 1], [], []>} : vector<256x12xbf16>, vector<12x64xbf16>, vector<256x64xf32> -> vector<256x64xf32>
    %c0_10 = arith.constant 0 : index
    %c0_11 = arith.constant 0 : index
    %39 = vector.load %arg3[%c0_10, %c0_11] : memref<1x64xf32, #tpu.memory_space<vmem>>, vector<1x64xf32>
    %40 = vector.broadcast %39 : vector<1x64xf32> to vector<256x64xf32>
    %41 = arith.addf %38, %40 : vector<256x64xf32>
    %cst_12 = arith.constant 0.000000e+00 : f32
    %42 = vector.broadcast %cst_12 : f32 to vector<256x64xf32>
    %43 = arith.maximumf %41, %42 : vector<256x64xf32>
    %c2_i32_13 = arith.constant 2 : i32
    %44 = tpu.dynamic_rotate %43 by %c2_i32_13 dim 0 : vector<256x64xf32>, i32 -> vector<256x64xf32>
    %cst_14 = arith.constant 0.000000e+00 : f32
    %45 = vector.shape_cast %18 : vector<256x1xi1> to vector<256x1xi1>
    %46 = vector.broadcast %45 : vector<256x1xi1> to vector<256x64xi1>
    %47 = vector.broadcast %cst_14 : f32 to vector<256x64xf32>
    %48 = arith.select %46, %44, %47 : vector<256x64xi1>, vector<256x64xf32>
    %c254_i32_15 = arith.constant 254 : i32
    %49 = tpu.dynamic_rotate %43 by %c254_i32_15 dim 0 : vector<256x64xf32>, i32 -> vector<256x64xf32>
    %cst_16 = arith.constant 0.000000e+00 : f32
    %50 = vector.shape_cast %20 : vector<256x1xi1> to vector<256x1xi1>
    %51 = vector.broadcast %50 : vector<256x1xi1> to vector<256x64xi1>
    %52 = vector.broadcast %cst_16 : f32 to vector<256x64xf32>
    %53 = arith.select %51, %49, %52 : vector<256x64xi1>, vector<256x64xf32>
    %54 = arith.truncf %48 : vector<256x64xf32> to vector<256x64xbf16>
    %55 = arith.truncf %43 : vector<256x64xf32> to vector<256x64xbf16>
    %56 = arith.truncf %53 : vector<256x64xf32> to vector<256x64xbf16>
    %57 = tpu.concatenate %54, %55, %56 in 1 : vector<256x64xbf16>, vector<256x64xbf16>, vector<256x64xbf16> -> vector<256x192xbf16>
    %c0_17 = arith.constant 0 : index
    %c0_18 = arith.constant 0 : index
    %58 = vector.load %arg4[%c0_17, %c0_18] : memref<192x64xbf16, #tpu.memory_space<vmem>>, vector<192x64xbf16>
    %cst_19 = arith.constant dense<0.000000e+00> : vector<256x64xf32>
    %59 = tpu.matmul %57, %58, %cst_19 {dimension_numbers = #tpu.dot_dimension_numbers<[1], [0], [0], [1], [0, 0, 1, 1], [], []>} : vector<256x192xbf16>, vector<192x64xbf16>, vector<256x64xf32> -> vector<256x64xf32>
    %c0_20 = arith.constant 0 : index
    %c0_21 = arith.constant 0 : index
    %60 = vector.load %arg5[%c0_20, %c0_21] : memref<1x64xf32, #tpu.memory_space<vmem>>, vector<1x64xf32>
    %61 = vector.broadcast %60 : vector<1x64xf32> to vector<256x64xf32>
    %62 = arith.addf %59, %61 : vector<256x64xf32>
    %cst_22 = arith.constant 0.000000e+00 : f32
    %63 = vector.broadcast %cst_22 : f32 to vector<256x64xf32>
    %64 = arith.maximumf %62, %63 : vector<256x64xf32>
    %65 = vector.shape_cast %64 : vector<256x64xf32> to vector<16x16x64xf32>
    %cst_23 = arith.constant dense<0.000000e+00> : vector<16x64xf32>
    %66 = vector.multi_reduction <add>, %65, %cst_23 [1] : vector<16x16x64xf32> to vector<16x64xf32>
    %cst_24 = arith.constant 6.250000e-02 : f32
    %67 = vector.broadcast %cst_24 : f32 to vector<16x64xf32>
    %68 = arith.mulf %66, %67 : vector<16x64xf32>
    %69 = arith.truncf %68 : vector<16x64xf32> to vector<16x64xbf16>
    %c0_25 = arith.constant 0 : index
    %c0_26 = arith.constant 0 : index
    %70 = vector.load %arg6[%c0_25, %c0_26] : memref<64x64xbf16, #tpu.memory_space<vmem>>, vector<64x64xbf16>
    %cst_27 = arith.constant dense<0.000000e+00> : vector<16x64xf32>
    %71 = tpu.matmul %69, %70, %cst_27 {dimension_numbers = #tpu.dot_dimension_numbers<[1], [0], [0], [1], [0, 0, 1, 1], [], []>} : vector<16x64xbf16>, vector<64x64xbf16>, vector<16x64xf32> -> vector<16x64xf32>
    %c0_28 = arith.constant 0 : index
    %c0_29 = arith.constant 0 : index
    %72 = vector.load %arg7[%c0_28, %c0_29] : memref<1x64xf32, #tpu.memory_space<vmem>>, vector<1x64xf32>
    %73 = vector.broadcast %72 : vector<1x64xf32> to vector<16x64xf32>
    %74 = arith.addf %71, %73 : vector<16x64xf32>
    %cst_30 = arith.constant 0.000000e+00 : f32
    %75 = vector.broadcast %cst_30 : f32 to vector<16x64xf32>
    %76 = arith.maximumf %74, %75 : vector<16x64xf32>
    %c0_31 = arith.constant 0 : index
    %c0_32 = arith.constant 0 : index
    %77 = vector.load %arg8[%c0_31, %c0_32] : memref<1x64xf32, #tpu.memory_space<vmem>>, vector<1x64xf32>
    %78 = vector.broadcast %77 : vector<1x64xf32> to vector<16x64xf32>
    %79 = arith.mulf %76, %78 : vector<16x64xf32>
    %cst_33 = arith.constant dense<0.000000e+00> : vector<16xf32>
    %80 = vector.multi_reduction <add>, %79, %cst_33 [1] : vector<16x64xf32> to vector<16xf32>
    %81 = vector.shape_cast %80 : vector<16xf32> to vector<16x1xf32>
    %c0_34 = arith.constant 0 : index
    %c0_35 = arith.constant 0 : index
    %82 = vector.load %arg9[%c0_34, %c0_35] : memref<1x1xf32, #tpu.memory_space<vmem>>, vector<1x1xf32>
    %83 = vector.broadcast %82 : vector<1x1xf32> to vector<16x1xf32>
    %84 = arith.addf %81, %83 : vector<16x1xf32>
    %c0_36 = arith.constant 0 : index
    %c0_37 = arith.constant 0 : index
    %85 = vector.load %arg10[%c0_36, %c0_37] : memref<16x1xf32, #tpu.memory_space<vmem>>, vector<16x1xf32>
    tpu.vector_store %arg10[%c0_36, %c0_37], %84 {strides = array<i32>} : memref<16x1xf32, #tpu.memory_space<vmem>>, vector<16x1xf32>,
    return
  }
  func.func @transform_0(%arg0: i32) -> (i32, i32, i32) {
    %c0_i32 = arith.constant 0 : i32
    %c0_i32_0 = arith.constant 0 : i32
    %c0_i32_1 = arith.constant 0 : i32
    return %arg0, %c0_i32, %c0_i32_0 : i32, i32, i32
  }
  func.func @transform_1(%arg0: i32) -> (i32, i32) {
    %c0_i32 = arith.constant 0 : i32
    %c0_i32_0 = arith.constant 0 : i32
    %c0_i32_1 = arith.constant 0 : i32
    return %c0_i32, %c0_i32_0 : i32, i32
  }
  func.func @transform_2(%arg0: i32) -> (i32, i32) {
    %c0_i32 = arith.constant 0 : i32
    %c0_i32_0 = arith.constant 0 : i32
    %c0_i32_1 = arith.constant 0 : i32
    return %c0_i32, %c0_i32_0 : i32, i32
  }
  func.func @transform_3(%arg0: i32) -> (i32, i32) {
    %c0_i32 = arith.constant 0 : i32
    %c0_i32_0 = arith.constant 0 : i32
    %c0_i32_1 = arith.constant 0 : i32
    return %c0_i32, %c0_i32_0 : i32, i32
  }
  func.func @transform_4(%arg0: i32) -> (i32, i32) {
    %c0_i32 = arith.constant 0 : i32
    %c0_i32_0 = arith.constant 0 : i32
    %c0_i32_1 = arith.constant 0 : i32
    return %c0_i32, %c0_i32_0 : i32, i32
  }
  func.func @transform_5(%arg0: i32) -> (i32, i32) {
    %c0_i32 = arith.constant 0 : i32
    %c0_i32_0 = arith.constant 0 : i32
    %c0_i32_1 = arith.constant 0 : i32
    return %c0_i32, %c0_i32_0 : i32, i32
  }
  func.func @transform_6(%arg0: i32) -> (i32, i32) {
    %c0_i32 = arith.constant 0 : i32
    %c0_i32_0 = arith.constant 0 : i32
    %c0_i32_1 = arith.constant 0 : i32
    return %c0_i32, %c0_i32_0 : i32, i32
  }
  func.func @transform_7(%arg0: i32) -> (i32, i32) {
    %c0_i32 = arith.constant 0 : i32
    %c0_i32_0 = arith.constant 0 : i32
    %c0_i32_1 = arith.constant 0 : i32
    return %c0_i32, %c0_i32_0 : i32, i32
  }
  func.func @transform_8(%arg0: i32) -> (i32, i32) {
    %c0_i32 = arith.constant 0 : i32
    %c0_i32_0 = arith.constant 0 : i32
    %c0_i32_1 = arith.constant 0 : i32
    return %c0_i32, %c0_i32_0 : i32, i32
  }
  func.func @transform_9(%arg0: i32) -> (i32, i32) {
    %c0_i32 = arith.constant 0 : i32
    %c0_i32_0 = arith.constant 0 : i32
    return %arg0, %c0_i32 : i32, i32
  }
}

</mosaic_0001>

<llo_original>
// kernel: tpu_custom_call.1
$region0: #{tpu_custom_call.1}
  #allocation0 [shape = 'u32[]', space=smem, size = 0x4, offset = 0x4, fixed_abs, tag = 'smem constant byte address 0x4 - core index']
  #allocation1 [shape = 'u32[144,128]{1,0:T(1,128)}', space=vmem, size = 0x12000, scoped, tag = 'internal scratch']
  #allocation2 [shape = 'f32[1,1]{1,0:T(1,128)S(1)}', space=vmem, size = 0x200, scoped, tag = 'scoped memory for tpu_custom_call.1']
  %s0 = inlined_call_operand.hbm [shape: f32[16,16,4], index: 0, kind: input, shape index: {}]
  %s1 = inlined_call_operand.hbm [shape: bf16[12,64], index: 1, kind: input, shape index: {}]
  %s2 = inlined_call_operand.hbm [shape: f32[1,64], index: 2, kind: input, shape index: {}]
  %s3 = inlined_call_operand.hbm [shape: bf16[192,64], index: 3, kind: input, shape index: {}]
  %s4 = inlined_call_operand.hbm [shape: f32[1,64], index: 4, kind: input, shape index: {}]
  %s5 = inlined_call_operand.hbm [shape: bf16[64,64], index: 5, kind: input, shape index: {}]
  %s6 = inlined_call_operand.hbm [shape: f32[1,64], index: 6, kind: input, shape index: {}]
  %s7 = inlined_call_operand.hbm [shape: f32[1,64], index: 7, kind: input, shape index: {}]
  %s8 = inlined_call_operand.<no memory space> [shape: f32[1,1], index: 8, kind: input, shape index: {}]
  %s9 = inlined_call_operand.hbm [shape: f32[16,1], index: 9, kind: output, shape index: {}]
  %s10 = sld [smem:[#allocation0]]
  $region78: #{tpu_custom_call.1} parent=0
    _
  %s12 = ssub.s32 1, %s10
  %s13 = scalar_select 0, %s12, %s10
  %v14 = vstv %s8
  %15 = vst [vmem:[#allocation2] sm:$0x1] %v14
  $region1: #{tpu_custom_call.1} parent=0
    #allocation3 [shape = 'u8[131072]{0}', space=vmem, size = 0x20000, scoped, tag = 'input window, operand 0, single buffered']
    #allocation4 [shape = 's32[1]{0}', space=sflag, size = 0x4, scoped, tag = 'scoped memory for tpu_custom_call.1']
    #allocation5 [shape = 's32[1]{0}', space=sflag, size = 0x4, scoped, tag = 'scoped memory for tpu_custom_call.1']
    #allocation6 [shape = 'u8[4096]{0}', space=vmem, size = 0x1000, scoped, tag = 'input window, operand 1, single buffered']
    #allocation7 [shape = 's32[1]{0}', space=sflag, size = 0x4, scoped, tag = 'scoped memory for tpu_custom_call.1']
    #allocation8 [shape = 'u8[512]{0}', space=vmem, size = 0x400, scoped, tag = 'input window, operand 2, single buffered']
    #allocation9 [shape = 'u8[49152]{0}', space=vmem, size = 0xc000, scoped, tag = 'input window, operand 3, single buffered']
    #allocation10 [shape = 's32[1]{0}', space=sflag, size = 0x4, scoped, tag = 'scoped memory for tpu_custom_call.1']
    #allocation11 [shape = 'u8[512]{0}', space=vmem, size = 0x400, scoped, tag = 'input window, operand 4, single buffered']
    #allocation12 [shape = 'u8[16384]{0}', space=vmem, size = 0x4000, scoped, tag = 'input window, operand 5, single buffered']
    #allocation13 [shape = 's32[1]{0}', space=sflag, size = 0x4, scoped, tag = 'scoped memory for tpu_custom_call.1']
    #allocation14 [shape = 'u8[512]{0}', space=vmem, size = 0x400, scoped, tag = 'input window, operand 6, single buffered']
    #allocation15 [shape = 'u8[512]{0}', space=vmem, size = 0x400, scoped, tag = 'input window, operand 7, single buffered']
    #allocation16 [shape = 's32[1]{0}', space=sflag, size = 0x4, scoped, tag = 'scoped memory for tpu_custom_call.1']
    #allocation17 [shape = 'u8[8192]{0}', space=vmem, size = 0x2000, scoped, tag = 'output window, operand 0, single buffered']
    %16 = vsyncpa [#allocation4], 0
    %17 = vsyncpa [#allocation7], 0
    %18 = vsyncpa [#allocation10], 0
    %19 = vsyncpa [#allocation13], 0
    %20 = vsyncpa [#allocation16], 0
    %21 = vsyncpa [#allocation5], 0
    // Predicated region
    $region2: #{tpu_custom_call.1} parent=1 // pred_check
      _
    $region3: #{tpu_custom_call.1} parent=1 // pred_check_branch
      %23 = sbr.rel (0) target = $region5
    $region4: #{tpu_custom_call.1} parent=1 // pred_region
      %s25 = ssub.s32 4096, 4096
      %26 = vsyncadd [#allocation4], %s25
      %s27 = sshll.u32 [#allocation3], 4
      %s28 = int_to_ptr.vmem [resolvable:$true] %s27
      %33 = dma.hbm_to_vmem [thread:$0]  %s0, 4096, %s28, [#allocation4], 128, 128, 8
    $region5: #{tpu_custom_call.1} parent=1 // pred_fallthru
      _
    // Predicated region
    $region6: #{tpu_custom_call.1} parent=1 // pred_check
      _
    $region7: #{tpu_custom_call.1} parent=1 // pred_check_branch
      %35 = sbr.rel (0) target = $region9
    $region8: #{tpu_custom_call.1} parent=1 // pred_region
      %s37 = ssub.s32 128, 128
      %38 = vsyncadd [#allocation7], %s37
      %s39 = sshll.u32 [#allocation6], 4
      %s40 = int_to_ptr.vmem [resolvable:$true] %s39
      %45 = dma.hbm_to_vmem [thread:$0]  %s1, 128, %s40, [#allocation7], 64, 64, 4
    $region9: #{tpu_custom_call.1} parent=1 // pred_fallthru
      _
    // Predicated region
    $region10: #{tpu_custom_call.1} parent=1 // pred_check
      _
    $region11: #{tpu_custom_call.1} parent=1 // pred_check_branch
      %47 = sbr.rel (0) target = $region13
    $region12: #{tpu_custom_call.1} parent=1 // pred_region
      %s49 = ssub.s32 16, 16
      %50 = vsyncadd [#allocation7], %s49
      %s52 = sshll.u32 [#allocation8], 4
      %s53 = int_to_ptr.vmem [resolvable:$true] %s52
      %55 = dma.hbm_to_vmem [thread:$0]  %s2, 16, %s53, [#allocation7]
    $region13: #{tpu_custom_call.1} parent=1 // pred_fallthru
      _
    // Predicated region
    $region14: #{tpu_custom_call.1} parent=1 // pred_check
      _
    $region15: #{tpu_custom_call.1} parent=1 // pred_check_branch
      %57 = sbr.rel (0) target = $region17
    $region16: #{tpu_custom_call.1} parent=1 // pred_region
      %s59 = ssub.s32 1536, 1536
      %60 = vsyncadd [#allocation10], %s59
      %s61 = sshll.u32 [#allocation9], 4
      %s62 = int_to_ptr.vmem [resolvable:$true] %s61
      %67 = dma.hbm_to_vmem [thread:$0]  %s3, 1536, %s62, [#allocation10], 64, 64, 4
    $region17: #{tpu_custom_call.1} parent=1 // pred_fallthru
      _
    // Predicated region
    $region18: #{tpu_custom_call.1} parent=1 // pred_check
      _
    $region19: #{tpu_custom_call.1} parent=1 // pred_check_branch
      %69 = sbr.rel (0) target = $region21
    $region20: #{tpu_custom_call.1} parent=1 // pred_region
      %s71 = ssub.s32 16, 16
      %72 = vsyncadd [#allocation10], %s71
      %s74 = sshll.u32 [#allocation11], 4
      %s75 = int_to_ptr.vmem [resolvable:$true] %s74
      %77 = dma.hbm_to_vmem [thread:$0]  %s4, 16, %s75, [#allocation10]
    $region21: #{tpu_custom_call.1} parent=1 // pred_fallthru
      _
    // Predicated region
    $region22: #{tpu_custom_call.1} parent=1 // pred_check
      _
    $region23: #{tpu_custom_call.1} parent=1 // pred_check_branch
      %79 = sbr.rel (0) target = $region25
    $region24: #{tpu_custom_call.1} parent=1 // pred_region
      %s81 = ssub.s32 512, 512
      %82 = vsyncadd [#allocation13], %s81
      %s83 = sshll.u32 [#allocation12], 4
      %s84 = int_to_ptr.vmem [resolvable:$true] %s83
      %89 = dma.hbm_to_vmem [thread:$0]  %s5, 512, %s84, [#allocation13], 64, 64, 4
    $region25: #{tpu_custom_call.1} parent=1 // pred_fallthru
      _
    // Predicated region
    $region26: #{tpu_custom_call.1} parent=1 // pred_check
      _
    $region27: #{tpu_custom_call.1} parent=1 // pred_check_branch
      %91 = sbr.rel (0) target = $region29
    $region28: #{tpu_custom_call.1} parent=1 // pred_region
      %s93 = ssub.s32 16, 16
      %94 = vsyncadd [#allocation13], %s93
      %s96 = sshll.u32 [#allocation14], 4
      %s97 = int_to_ptr.vmem [resolvable:$true] %s96
      %99 = dma.hbm_to_vmem [thread:$0]  %s6, 16, %s97, [#allocation13]
    $region29: #{tpu_custom_call.1} parent=1 // pred_fallthru
      _
    // Predicated region
    $region30: #{tpu_custom_call.1} parent=1 // pred_check
      _
    $region31: #{tpu_custom_call.1} parent=1 // pred_check_branch
      %101 = sbr.rel (0) target = $region33
    $region32: #{tpu_custom_call.1} parent=1 // pred_region
      %s103 = ssub.s32 16, 16
      %104 = vsyncadd [#allocation16], %s103
      %s106 = sshll.u32 [#allocation15], 4
      %s107 = int_to_ptr.vmem [resolvable:$true] %s106
      %109 = dma.hbm_to_vmem [thread:$0]  %s7, 16, %s107, [#allocation16]
    $region33: #{tpu_custom_call.1} parent=1 // pred_fallthru
      _
    // Predicated region
    $region34: #{tpu_custom_call.1} parent=1 // pred_check
      _
    $region35: #{tpu_custom_call.1} parent=1 // pred_check_branch
      %111 = sbr.rel (0) target = $region37
    $region36: #{tpu_custom_call.1} parent=1 // pred_region
      _
    $region37: #{tpu_custom_call.1} parent=1 // pred_fallthru
      _
    // Predicated region
    $region38: #{tpu_custom_call.1} parent=1 // pred_check
      _
    $region39: #{tpu_custom_call.1} parent=1 // pred_check_branch
      %113 = sbr.rel (0) target = $region41
    $region40: #{tpu_custom_call.1} parent=1 // pred_region
      %114 = dma.done [#allocation4], 4096
    $region41: #{tpu_custom_call.1} parent=1 // pred_fallthru
      _
    // Predicated region
    $region42: #{tpu_custom_call.1} parent=1 // pred_check
      _
    $region43: #{tpu_custom_call.1} parent=1 // pred_check_branch
      %116 = sbr.rel (0) target = $region45
    $region44: #{tpu_custom_call.1} parent=1 // pred_region
      %117 = dma.done [#allocation7], 128
    $region45: #{tpu_custom_call.1} parent=1 // pred_fallthru
      _
    // Predicated region
    $region46: #{tpu_custom_call.1} parent=1 // pred_check
      _
    $region47: #{tpu_custom_call.1} parent=1 // pred_check_branch
      %119 = sbr.rel (0) target = $region49
    $region48: #{tpu_custom_call.1} parent=1 // pred_region
      %120 = dma.done [#allocation7], 16
    $region49: #{tpu_custom_call.1} parent=1 // pred_fallthru
      _
    // Predicated region
    $region50: #{tpu_custom_call.1} parent=1 // pred_check
      _
    $region51: #{tpu_custom_call.1} parent=1 // pred_check_branch
      %122 = sbr.rel (0) target = $region53
    $region52: #{tpu_custom_call.1} parent=1 // pred_region
      %123 = dma.done [#allocation10], 1536
    $region53: #{tpu_custom_call.1} parent=1 // pred_fallthru
      _
    // Predicated region
    $region54: #{tpu_custom_call.1} parent=1 // pred_check
      _
    $region55: #{tpu_custom_call.1} parent=1 // pred_check_branch
      %125 = sbr.rel (0) target = $region57
    $region56: #{tpu_custom_call.1} parent=1 // pred_region
      %126 = dma.done [#allocation10], 16
    $region57: #{tpu_custom_call.1} parent=1 // pred_fallthru
      _
    // Predicated region
    $region58: #{tpu_custom_call.1} parent=1 // pred_check
      _
    $region59: #{tpu_custom_call.1} parent=1 // pred_check_branch
      %128 = sbr.rel (0) target = $region61
    $region60: #{tpu_custom_call.1} parent=1 // pred_region
      %129 = dma.done [#allocation13], 512
    $region61: #{tpu_custom_call.1} parent=1 // pred_fallthru
      _
    // Predicated region
    $region62: #{tpu_custom_call.1} parent=1 // pred_check
      _
    $region63: #{tpu_custom_call.1} parent=1 // pred_check_branch
      %131 = sbr.rel (0) target = $region65
    $region64: #{tpu_custom_call.1} parent=1 // pred_region
      %132 = dma.done [#allocation13], 16
    $region65: #{tpu_custom_call.1} parent=1 // pred_fallthru
      _
    // Predicated region
    $region66: #{tpu_custom_call.1} parent=1 // pred_check
      _
    $region67: #{tpu_custom_call.1} parent=1 // pred_check_branch
      %134 = sbr.rel (0) target = $region69
    $region68: #{tpu_custom_call.1} parent=1 // pred_region
      %135 = dma.done [#allocation16], 16
    $region69: #{tpu_custom_call.1} parent=1 // pred_fallthru
      _
    %v137 = vlaneseq
    %v138 = vshrl.u32 %v137, 7
    %v139 = vadd.s32 %v138, 8
    %v140 = vadd.s32 %v138, 16
    %v141 = vadd.s32 %v138, 24
    %v142 = vadd.s32 %v138, 32
    %v143 = vadd.s32 %v138, 40
    %v144 = vadd.s32 %v138, 48
    %v145 = vadd.s32 %v138, 56
    %v146 = vadd.s32 %v138, 64
    %v147 = vadd.s32 %v138, 72
    %v148 = vadd.s32 %v138, 80
    %v149 = vadd.s32 %v138, 88
    %v150 = vadd.s32 %v138, 96
    %v151 = vadd.s32 %v138, 104
    %v152 = vadd.s32 %v138, 112
    %v153 = vadd.s32 %v138, 120
    %v154 = vadd.s32 %v138, 128
    %v155 = vadd.s32 %v138, 136
    %v156 = vadd.s32 %v138, 144
    %v157 = vadd.s32 %v138, 152
    %v158 = vadd.s32 %v138, 160
    %v159 = vadd.s32 %v138, 168
    %v160 = vadd.s32 %v138, 176
    %v161 = vadd.s32 %v138, 184
    %v162 = vadd.s32 %v138, 192
    %v163 = vadd.s32 %v138, 200
    %v164 = vadd.s32 %v138, 208
    %v165 = vadd.s32 %v138, 216
    %v166 = vadd.s32 %v138, 224
    %v167 = vadd.s32 %v138, 232
    %v168 = vadd.s32 %v138, 240
    %v169 = vadd.s32 %v138, 248
    %vm170 = vcmp.lt.s32.totalorder %v138, 0
    %v171 = vsub.s32 0, %v138
    %v172 = vsel %vm170, %v171, %v138
    %v173 = vshrl.u32 %v172, 4
    %v174 = vand.u32 %v172, 15
    %v175 = vsub.s32 0, %v174
    %v176 = vsel %vm170, %v175, %v174
    %vm177 = vcmp.lt.s32.totalorder %v139, 0
    %v178 = vsub.s32 0, %v139
    %v179 = vsel %vm177, %v178, %v139
    %v180 = vshrl.u32 %v179, 4
    %v181 = vand.u32 %v179, 15
    %v182 = vsub.s32 0, %v181
    %v183 = vsel %vm177, %v182, %v181
    %vm184 = vcmp.lt.s32.totalorder %v140, 0
    %v185 = vsub.s32 0, %v140
    %v186 = vsel %vm184, %v185, %v140
    %v187 = vshrl.u32 %v186, 4
    %v188 = vand.u32 %v186, 15
    %v189 = vsub.s32 0, %v188
    %v190 = vsel %vm184, %v189, %v188
    %vm191 = vcmp.lt.s32.totalorder %v141, 0
    %v192 = vsub.s32 0, %v141
    %v193 = vsel %vm191, %v192, %v141
    %v194 = vshrl.u32 %v193, 4
    %v195 = vand.u32 %v193, 15
    %v196 = vsub.s32 0, %v195
    %v197 = vsel %vm191, %v196, %v195
    %vm198 = vcmp.lt.s32.totalorder %v142, 0
    %v199 = vsub.s32 0, %v142
    %v200 = vsel %vm198, %v199, %v142
    %v201 = vshrl.u32 %v200, 4
    %v202 = vand.u32 %v200, 15
    %v203 = vsub.s32 0, %v202
    %v204 = vsel %vm198, %v203, %v202
    %vm205 = vcmp.lt.s32.totalorder %v143, 0
    %v206 = vsub.s32 0, %v143
    %v207 = vsel %vm205, %v206, %v143
    %v208 = vshrl.u32 %v207, 4
    %v209 = vand.u32 %v207, 15
    %v210 = vsub.s32 0, %v209
    %v211 = vsel %vm205, %v210, %v209
    %vm212 = vcmp.lt.s32.totalorder %v144, 0
    %v213 = vsub.s32 0, %v144
    %v214 = vsel %vm212, %v213, %v144
    %v215 = vshrl.u32 %v214, 4
    %v216 = vand.u32 %v214, 15
    %v217 = vsub.s32 0, %v216
    %v218 = vsel %vm212, %v217, %v216
    %vm219 = vcmp.lt.s32.totalorder %v145, 0
    %v220 = vsub.s32 0, %v145
    %v221 = vsel %vm219, %v220, %v145
    %v222 = vshrl.u32 %v221, 4
    %v223 = vand.u32 %v221, 15
    %v224 = vsub.s32 0, %v223
    %v225 = vsel %vm219, %v224, %v223
    %vm226 = vcmp.lt.s32.totalorder %v146, 0
    %v227 = vsub.s32 0, %v146
    %v228 = vsel %vm226, %v227, %v146
    %v229 = vshrl.u32 %v228, 4
    %v230 = vand.u32 %v228, 15
    %v231 = vsub.s32 0, %v230
    %v232 = vsel %vm226, %v231, %v230
    %vm233 = vcmp.lt.s32.totalorder %v147, 0
    %v234 = vsub.s32 0, %v147
    %v235 = vsel %vm233, %v234, %v147
    %v236 = vshrl.u32 %v235, 4
    %v237 = vand.u32 %v235, 15
    %v238 = vsub.s32 0, %v237
    %v239 = vsel %vm233, %v238, %v237
    %vm240 = vcmp.lt.s32.totalorder %v148, 0
    %v241 = vsub.s32 0, %v148
    %v242 = vsel %vm240, %v241, %v148
    %v243 = vshrl.u32 %v242, 4
    %v244 = vand.u32 %v242, 15
    %v245 = vsub.s32 0, %v244
    %v246 = vsel %vm240, %v245, %v244
    %vm247 = vcmp.lt.s32.totalorder %v149, 0
    %v248 = vsub.s32 0, %v149
    %v249 = vsel %vm247, %v248, %v149
    %v250 = vshrl.u32 %v249, 4
    %v251 = vand.u32 %v249, 15
    %v252 = vsub.s32 0, %v251
    %v253 = vsel %vm247, %v252, %v251
    %vm254 = vcmp.lt.s32.totalorder %v150, 0
    %v255 = vsub.s32 0, %v150
    %v256 = vsel %vm254, %v255, %v150
    %v257 = vshrl.u32 %v256, 4
    %v258 = vand.u32 %v256, 15
    %v259 = vsub.s32 0, %v258
    %v260 = vsel %vm254, %v259, %v258
    %vm261 = vcmp.lt.s32.totalorder %v151, 0
    %v262 = vsub.s32 0, %v151
    %v263 = vsel %vm261, %v262, %v151
    %v264 = vshrl.u32 %v263, 4
    %v265 = vand.u32 %v263, 15
    %v266 = vsub.s32 0, %v265
    %v267 = vsel %vm261, %v266, %v265
    %vm268 = vcmp.lt.s32.totalorder %v152, 0
    %v269 = vsub.s32 0, %v152
    %v270 = vsel %vm268, %v269, %v152
    %v271 = vshrl.u32 %v270, 4
    %v272 = vand.u32 %v270, 15
    %v273 = vsub.s32 0, %v272
    %v274 = vsel %vm268, %v273, %v272
    %vm275 = vcmp.lt.s32.totalorder %v153, 0
    %v276 = vsub.s32 0, %v153
    %v277 = vsel %vm275, %v276, %v153
    %v278 = vshrl.u32 %v277, 4
    %v279 = vand.u32 %v277, 15
    %v280 = vsub.s32 0, %v279
    %v281 = vsel %vm275, %v280, %v279
    %vm282 = vcmp.lt.s32.totalorder %v154, 0
    %v283 = vsub.s32 0, %v154
    %v284 = vsel %vm282, %v283, %v154
    %v285 = vshrl.u32 %v284, 4
    %v286 = vand.u32 %v284, 15
    %v287 = vsub.s32 0, %v286
    %v288 = vsel %vm282, %v287, %v286
    %vm289 = vcmp.lt.s32.totalorder %v155, 0
    %v290 = vsub.s32 0, %v155
    %v291 = vsel %vm289, %v290, %v155
    %v292 = vshrl.u32 %v291, 4
    %v293 = vand.u32 %v291, 15
    %v294 = vsub.s32 0, %v293
    %v295 = vsel %vm289, %v294, %v293
    %vm296 = vcmp.lt.s32.totalorder %v156, 0
    %v297 = vsub.s32 0, %v156
    %v298 = vsel %vm296, %v297, %v156
    %v299 = vshrl.u32 %v298, 4
    %v300 = vand.u32 %v298, 15
    %v301 = vsub.s32 0, %v300
    %v302 = vsel %vm296, %v301, %v300
    %vm303 = vcmp.lt.s32.totalorder %v157, 0
    %v304 = vsub.s32 0, %v157
    %v305 = vsel %vm303, %v304, %v157
    %v306 = vshrl.u32 %v305, 4
    %v307 = vand.u32 %v305, 15
    %v308 = vsub.s32 0, %v307
    %v309 = vsel %vm303, %v308, %v307
    %vm310 = vcmp.lt.s32.totalorder %v158, 0
    %v311 = vsub.s32 0, %v158
    %v312 = vsel %vm310, %v311, %v158
    %v313 = vshrl.u32 %v312, 4
    %v314 = vand.u32 %v312, 15
    %v315 = vsub.s32 0, %v314
    %v316 = vsel %vm310, %v315, %v314
    %vm317 = vcmp.lt.s32.totalorder %v159, 0
    %v318 = vsub.s32 0, %v159
    %v319 = vsel %vm317, %v318, %v159
    %v320 = vshrl.u32 %v319, 4
    %v321 = vand.u32 %v319, 15
    %v322 = vsub.s32 0, %v321
    %v323 = vsel %vm317, %v322, %v321
    %vm324 = vcmp.lt.s32.totalorder %v160, 0
    %v325 = vsub.s32 0, %v160
    %v326 = vsel %vm324, %v325, %v160
    %v327 = vshrl.u32 %v326, 4
    %v328 = vand.u32 %v326, 15
    %v329 = vsub.s32 0, %v328
    %v330 = vsel %vm324, %v329, %v328
    %vm331 = vcmp.lt.s32.totalorder %v161, 0
    %v332 = vsub.s32 0, %v161
    %v333 = vsel %vm331, %v332, %v161
    %v334 = vshrl.u32 %v333, 4
    %v335 = vand.u32 %v333, 15
    %v336 = vsub.s32 0, %v335
    %v337 = vsel %vm331, %v336, %v335
    %vm338 = vcmp.lt.s32.totalorder %v162, 0
    %v339 = vsub.s32 0, %v162
    %v340 = vsel %vm338, %v339, %v162
    %v341 = vshrl.u32 %v340, 4
    %v342 = vand.u32 %v340, 15
    %v343 = vsub.s32 0, %v342
    %v344 = vsel %vm338, %v343, %v342
    %vm345 = vcmp.lt.s32.totalorder %v163, 0
    %v346 = vsub.s32 0, %v163
    %v347 = vsel %vm345, %v346, %v163
    %v348 = vshrl.u32 %v347, 4
    %v349 = vand.u32 %v347, 15
    %v350 = vsub.s32 0, %v349
    %v351 = vsel %vm345, %v350, %v349
    %vm352 = vcmp.lt.s32.totalorder %v164, 0
    %v353 = vsub.s32 0, %v164
    %v354 = vsel %vm352, %v353, %v164
    %v355 = vshrl.u32 %v354, 4
    %v356 = vand.u32 %v354, 15
    %v357 = vsub.s32 0, %v356
    %v358 = vsel %vm352, %v357, %v356
    %vm359 = vcmp.lt.s32.totalorder %v165, 0
    %v360 = vsub.s32 0, %v165
    %v361 = vsel %vm359, %v360, %v165
    %v362 = vshrl.u32 %v361, 4
    %v363 = vand.u32 %v361, 15
    %v364 = vsub.s32 0, %v363
    %v365 = vsel %vm359, %v364, %v363
    %vm366 = vcmp.lt.s32.totalorder %v166, 0
    %v367 = vsub.s32 0, %v166
    %v368 = vsel %vm366, %v367, %v166
    %v369 = vshrl.u32 %v368, 4
    %v370 = vand.u32 %v368, 15
    %v371 = vsub.s32 0, %v370
    %v372 = vsel %vm366, %v371, %v370
    %vm373 = vcmp.lt.s32.totalorder %v167, 0
    %v374 = vsub.s32 0, %v167
    %v375 = vsel %vm373, %v374, %v167
    %v376 = vshrl.u32 %v375, 4
    %v377 = vand.u32 %v375, 15
    %v378 = vsub.s32 0, %v377
    %v379 = vsel %vm373, %v378, %v377
    %vm380 = vcmp.lt.s32.totalorder %v168, 0
    %v381 = vsub.s32 0, %v168
    %v382 = vsel %vm380, %v381, %v168
    %v383 = vshrl.u32 %v382, 4
    %v384 = vand.u32 %v382, 15
    %v385 = vsub.s32 0, %v384
    %v386 = vsel %vm380, %v385, %v384
    %vm387 = vcmp.lt.s32.totalorder %v169, 0
    %v388 = vsub.s32 0, %v169
    %v389 = vsel %vm387, %v388, %v169
    %v390 = vshrl.u32 %v389, 4
    %v391 = vand.u32 %v389, 15
    %v392 = vsub.s32 0, %v391
    %v393 = vsel %vm387, %v392, %v391
    %vm394 = vcmp.ne.s32.totalorder %v176, 0
    %vm395 = vcmp.ne.s32.totalorder %v183, 0
    %vm396 = vcmp.ne.s32.totalorder %v190, 0
    %vm397 = vcmp.ne.s32.totalorder %v197, 0
    %vm398 = vcmp.ne.s32.totalorder %v204, 0
    %vm399 = vcmp.ne.s32.totalorder %v211, 0
    %vm400 = vcmp.ne.s32.totalorder %v218, 0
    %vm401 = vcmp.ne.s32.totalorder %v225, 0
    %vm402 = vcmp.ne.s32.totalorder %v232, 0
    %vm403 = vcmp.ne.s32.totalorder %v239, 0
    %vm404 = vcmp.ne.s32.totalorder %v246, 0
    %vm405 = vcmp.ne.s32.totalorder %v253, 0
    %vm406 = vcmp.ne.s32.totalorder %v260, 0
    %vm407 = vcmp.ne.s32.totalorder %v267, 0
    %vm408 = vcmp.ne.s32.totalorder %v274, 0
    %vm409 = vcmp.ne.s32.totalorder %v281, 0
    %vm410 = vcmp.ne.s32.totalorder %v288, 0
    %vm411 = vcmp.ne.s32.totalorder %v295, 0
    %vm412 = vcmp.ne.s32.totalorder %v302, 0
    %vm413 = vcmp.ne.s32.totalorder %v309, 0
    %vm414 = vcmp.ne.s32.totalorder %v316, 0
    %vm415 = vcmp.ne.s32.totalorder %v323, 0
    %vm416 = vcmp.ne.s32.totalorder %v330, 0
    %vm417 = vcmp.ne.s32.totalorder %v337, 0
    %vm418 = vcmp.ne.s32.totalorder %v344, 0
    %vm419 = vcmp.ne.s32.totalorder %v351, 0
    %vm420 = vcmp.ne.s32.totalorder %v358, 0
    %vm421 = vcmp.ne.s32.totalorder %v365, 0
    %vm422 = vcmp.ne.s32.totalorder %v372, 0
    %vm423 = vcmp.ne.s32.totalorder %v379, 0
    %vm424 = vcmp.ne.s32.totalorder %v386, 0
    %vm425 = vcmp.ne.s32.totalorder %v393, 0
    %vm426 = vcmp.lt.s32.totalorder %v176, 0
    %vm427 = vcmp.lt.s32.totalorder %v183, 0
    %vm428 = vcmp.lt.s32.totalorder %v190, 0
    %vm429 = vcmp.lt.s32.totalorder %v197, 0
    %vm430 = vcmp.lt.s32.totalorder %v204, 0
    %vm431 = vcmp.lt.s32.totalorder %v211, 0
    %vm432 = vcmp.lt.s32.totalorder %v218, 0
    %vm433 = vcmp.lt.s32.totalorder %v225, 0
    %vm434 = vcmp.lt.s32.totalorder %v232, 0
    %vm435 = vcmp.lt.s32.totalorder %v239, 0
    %vm436 = vcmp.lt.s32.totalorder %v246, 0
    %vm437 = vcmp.lt.s32.totalorder %v253, 0
    %vm438 = vcmp.lt.s32.totalorder %v260, 0
    %vm439 = vcmp.lt.s32.totalorder %v267, 0
    %vm440 = vcmp.lt.s32.totalorder %v274, 0
    %vm441 = vcmp.lt.s32.totalorder %v281, 0
    %vm442 = vcmp.lt.s32.totalorder %v288, 0
    %vm443 = vcmp.lt.s32.totalorder %v295, 0
    %vm444 = vcmp.lt.s32.totalorder %v302, 0
    %vm445 = vcmp.lt.s32.totalorder %v309, 0
    %vm446 = vcmp.lt.s32.totalorder %v316, 0
    %vm447 = vcmp.lt.s32.totalorder %v323, 0
    %vm448 = vcmp.lt.s32.totalorder %v330, 0
    %vm449 = vcmp.lt.s32.totalorder %v337, 0
    %vm450 = vcmp.lt.s32.totalorder %v344, 0
    %vm451 = vcmp.lt.s32.totalorder %v351, 0
    %vm452 = vcmp.lt.s32.totalorder %v358, 0
    %vm453 = vcmp.lt.s32.totalorder %v365, 0
    %vm454 = vcmp.lt.s32.totalorder %v372, 0
    %vm455 = vcmp.lt.s32.totalorder %v379, 0
    %vm456 = vcmp.lt.s32.totalorder %v386, 0
    %vm457 = vcmp.lt.s32.totalorder %v393, 0
    %vm458 = vmand %vm426, %vm394
    %vm459 = vmand %vm427, %vm395
    %vm460 = vmand %vm428, %vm396
    %vm461 = vmand %vm429, %vm397
    %vm462 = vmand %vm430, %vm398
    %vm463 = vmand %vm431, %vm399
    %vm464 = vmand %vm432, %vm400
    %vm465 = vmand %vm433, %vm401
    %vm466 = vmand %vm434, %vm402
    %vm467 = vmand %vm435, %vm403
    %vm468 = vmand %vm436, %vm404
    %vm469 = vmand %vm437, %vm405
    %vm470 = vmand %vm438, %vm406
    %vm471 = vmand %vm439, %vm407
    %vm472 = vmand %vm440, %vm408
    %vm473 = vmand %vm441, %vm409
    %vm474 = vmand %vm442, %vm410
    %vm475 = vmand %vm443, %vm411
    %vm476 = vmand %vm444, %vm412
    %vm477 = vmand %vm445, %vm413
    %vm478 = vmand %vm446, %vm414
    %vm479 = vmand %vm447, %vm415
    %vm480 = vmand %vm448, %vm416
    %vm481 = vmand %vm449, %vm417
    %vm482 = vmand %vm450, %vm418
    %vm483 = vmand %vm451, %vm419
    %vm484 = vmand %vm452, %vm420
    %vm485 = vmand %vm453, %vm421
    %vm486 = vmand %vm454, %vm422
    %vm487 = vmand %vm455, %vm423
    %vm488 = vmand %vm456, %vm424
    %vm489 = vmand %vm457, %vm425
    %v490 = vadd.s32 %v176, 16
    %v491 = vadd.s32 %v183, 16
    %v492 = vadd.s32 %v190, 16
    %v493 = vadd.s32 %v197, 16
    %v494 = vadd.s32 %v204, 16
    %v495 = vadd.s32 %v211, 16
    %v496 = vadd.s32 %v218, 16
    %v497 = vadd.s32 %v225, 16
    %v498 = vadd.s32 %v232, 16
    %v499 = vadd.s32 %v239, 16
    %v500 = vadd.s32 %v246, 16
    %v501 = vadd.s32 %v253, 16
    %v502 = vadd.s32 %v260, 16
    %v503 = vadd.s32 %v267, 16
    %v504 = vadd.s32 %v274, 16
    %v505 = vadd.s32 %v281, 16
    %v506 = vadd.s32 %v288, 16
    %v507 = vadd.s32 %v295, 16
    %v508 = vadd.s32 %v302, 16
    %v509 = vadd.s32 %v309, 16
    %v510 = vadd.s32 %v316, 16
    %v511 = vadd.s32 %v323, 16
    %v512 = vadd.s32 %v330, 16
    %v513 = vadd.s32 %v337, 16
    %v514 = vadd.s32 %v344, 16
    %v515 = vadd.s32 %v351, 16
    %v516 = vadd.s32 %v358, 16
    %v517 = vadd.s32 %v365, 16
    %v518 = vadd.s32 %v372, 16
    %v519 = vadd.s32 %v379, 16
    %v520 = vadd.s32 %v386, 16
    %v521 = vadd.s32 %v393, 16
    %v522 = vsel %vm458, %v490, %v176
    %v523 = vsel %vm459, %v491, %v183
    %v524 = vsel %vm460, %v492, %v190
    %v525 = vsel %vm461, %v493, %v197
    %v526 = vsel %vm462, %v494, %v204
    %v527 = vsel %vm463, %v495, %v211
    %v528 = vsel %vm464, %v496, %v218
    %v529 = vsel %vm465, %v497, %v225
    %v530 = vsel %vm466, %v498, %v232
    %v531 = vsel %vm467, %v499, %v239
    %v532 = vsel %vm468, %v500, %v246
    %v533 = vsel %vm469, %v501, %v253
    %v534 = vsel %vm470, %v502, %v260
    %v535 = vsel %vm471, %v503, %v267
    %v536 = vsel %vm472, %v504, %v274
    %v537 = vsel %vm473, %v505, %v281
    %v538 = vsel %vm474, %v506, %v288
    %v539 = vsel %vm475, %v507, %v295
    %v540 = vsel %vm476, %v508, %v302
    %v541 = vsel %vm477, %v509, %v309
    %v542 = vsel %vm478, %v510, %v316
    %v543 = vsel %vm479, %v511, %v323
    %v544 = vsel %vm480, %v512, %v330
    %v545 = vsel %vm481, %v513, %v337
    %v546 = vsel %vm482, %v514, %v344
    %v547 = vsel %vm483, %v515, %v351
    %v548 = vsel %vm484, %v516, %v358
    %v549 = vsel %vm485, %v517, %v365
    %v550 = vsel %vm486, %v518, %v372
    %v551 = vsel %vm487, %v519, %v379
    %v552 = vsel %vm488, %v520, %v386
    %v553 = vsel %vm489, %v521, %v393
    %vm554 = vcmp.ge.s32.totalorder %v522, 2
    %vm555 = vcmp.ge.s32.totalorder %v523, 2
    %vm556 = vcmp.ge.s32.totalorder %v524, 2
    %vm557 = vcmp.ge.s32.totalorder %v525, 2
    %vm558 = vcmp.ge.s32.totalorder %v526, 2
    %vm559 = vcmp.ge.s32.totalorder %v527, 2
    %vm560 = vcmp.ge.s32.totalorder %v528, 2
    %vm561 = vcmp.ge.s32.totalorder %v529, 2
    %vm562 = vcmp.ge.s32.totalorder %v530, 2
    %vm563 = vcmp.ge.s32.totalorder %v531, 2
    %vm564 = vcmp.ge.s32.totalorder %v532, 2
    %vm565 = vcmp.ge.s32.totalorder %v533, 2
    %vm566 = vcmp.ge.s32.totalorder %v534, 2
    %vm567 = vcmp.ge.s32.totalorder %v535, 2
    %vm568 = vcmp.ge.s32.totalorder %v536, 2
    %vm569 = vcmp.ge.s32.totalorder %v537, 2
    %vm570 = vcmp.ge.s32.totalorder %v538, 2
    %vm571 = vcmp.ge.s32.totalorder %v539, 2
    %vm572 = vcmp.ge.s32.totalorder %v540, 2
    %vm573 = vcmp.ge.s32.totalorder %v541, 2
    %vm574 = vcmp.ge.s32.totalorder %v542, 2
    %vm575 = vcmp.ge.s32.totalorder %v543, 2
    %vm576 = vcmp.ge.s32.totalorder %v544, 2
    %vm577 = vcmp.ge.s32.totalorder %v545, 2
    %vm578 = vcmp.ge.s32.totalorder %v546, 2
    %vm579 = vcmp.ge.s32.totalorder %v547, 2
    %vm580 = vcmp.ge.s32.totalorder %v548, 2
    %vm581 = vcmp.ge.s32.totalorder %v549, 2
    %vm582 = vcmp.ge.s32.totalorder %v550, 2
    %vm583 = vcmp.ge.s32.totalorder %v551, 2
    %vm584 = vcmp.ge.s32.totalorder %v552, 2
    %vm585 = vcmp.ge.s32.totalorder %v553, 2
    %vm586 = vcmp.lt.s32.totalorder %v522, 14
    %vm587 = vcmp.lt.s32.totalorder %v523, 14
    %vm588 = vcmp.lt.s32.totalorder %v524, 14
    %vm589 = vcmp.lt.s32.totalorder %v525, 14
    %vm590 = vcmp.lt.s32.totalorder %v526, 14
    %vm591 = vcmp.lt.s32.totalorder %v527, 14
    %vm592 = vcmp.lt.s32.totalorder %v528, 14
    %vm593 = vcmp.lt.s32.totalorder %v529, 14
    %vm594 = vcmp.lt.s32.totalorder %v530, 14
    %vm595 = vcmp.lt.s32.totalorder %v531, 14
    %vm596 = vcmp.lt.s32.totalorder %v532, 14
    %vm597 = vcmp.lt.s32.totalorder %v533, 14
    %vm598 = vcmp.lt.s32.totalorder %v534, 14
    %vm599 = vcmp.lt.s32.totalorder %v535, 14
    %vm600 = vcmp.lt.s32.totalorder %v536, 14
    %vm601 = vcmp.lt.s32.totalorder %v537, 14
    %vm602 = vcmp.lt.s32.totalorder %v538, 14
    %vm603 = vcmp.lt.s32.totalorder %v539, 14
    %vm604 = vcmp.lt.s32.totalorder %v540, 14
    %vm605 = vcmp.lt.s32.totalorder %v541, 14
    %vm606 = vcmp.lt.s32.totalorder %v542, 14
    %vm607 = vcmp.lt.s32.totalorder %v543, 14
    %vm608 = vcmp.lt.s32.totalorder %v544, 14
    %vm609 = vcmp.lt.s32.totalorder %v545, 14
    %vm610 = vcmp.lt.s32.totalorder %v546, 14
    %vm611 = vcmp.lt.s32.totalorder %v547, 14
    %vm612 = vcmp.lt.s32.totalorder %v548, 14
    %vm613 = vcmp.lt.s32.totalorder %v549, 14
    %vm614 = vcmp.lt.s32.totalorder %v550, 14
    %vm615 = vcmp.lt.s32.totalorder %v551, 14
    %vm616 = vcmp.lt.s32.totalorder %v552, 14
    %vm617 = vcmp.lt.s32.totalorder %v553, 14
    %v618 = vld [vmem:[#allocation3] sm:$0xff]
    %v619 = vld [vmem:[#allocation3 + $0x8] sm:$0xff]
    %v620 = vld [vmem:[#allocation3 + $0x10] sm:$0xff]
    %v621 = vld [vmem:[#allocation3 + $0x18] sm:$0xff]
    %v622 = vld [vmem:[#allocation3 + $0x20] sm:$0xff]
    %v623 = vld [vmem:[#allocation3 + $0x28] sm:$0xff]
    %v624 = vld [vmem:[#allocation3 + $0x30] sm:$0xff]
    %v625 = vld [vmem:[#allocation3 + $0x38] sm:$0xff]
    %v626 = vld [vmem:[#allocation3 + $0x40] sm:$0xff]
    %v627 = vld [vmem:[#allocation3 + $0x48] sm:$0xff]
    %v628 = vld [vmem:[#allocation3 + $0x50] sm:$0xff]
    %v629 = vld [vmem:[#allocation3 + $0x58] sm:$0xff]
    %v630 = vld [vmem:[#allocation3 + $0x60] sm:$0xff]
    %v631 = vld [vmem:[#allocation3 + $0x68] sm:$0xff]
    %v632 = vld [vmem:[#allocation3 + $0x70] sm:$0xff]
    %v633 = vld [vmem:[#allocation3 + $0x78] sm:$0xff]
    %v634 = vld [vmem:[#allocation3 + $0x80] sm:$0xff]
    %v635 = vld [vmem:[#allocation3 + $0x88] sm:$0xff]
    %v636 = vld [vmem:[#allocation3 + $0x90] sm:$0xff]
    %v637 = vld [vmem:[#allocation3 + $0x98] sm:$0xff]
    %v638 = vld [vmem:[#allocation3 + $0xa0] sm:$0xff]
    %v639 = vld [vmem:[#allocation3 + $0xa8] sm:$0xff]
    %v640 = vld [vmem:[#allocation3 + $0xb0] sm:$0xff]
    %v641 = vld [vmem:[#allocation3 + $0xb8] sm:$0xff]
    %v642 = vld [vmem:[#allocation3 + $0xc0] sm:$0xff]
    %v643 = vld [vmem:[#allocation3 + $0xc8] sm:$0xff]
    %v644 = vld [vmem:[#allocation3 + $0xd0] sm:$0xff]
    %v645 = vld [vmem:[#allocation3 + $0xd8] sm:$0xff]
    %v646 = vld [vmem:[#allocation3 + $0xe0] sm:$0xff]
    %v647 = vld [vmem:[#allocation3 + $0xe8] sm:$0xff]
    %v648 = vld [vmem:[#allocation3 + $0xf0] sm:$0xff]
    %v649 = vld [vmem:[#allocation3 + $0xf8] sm:$0xff]
    %v650 = vrot.slane %v618, 6
    %v651 = vrot.slane %v619, 6
    %v652 = vrot.slane %v620, 6
    %v653 = vrot.slane %v621, 6
    %v654 = vrot.slane %v622, 6
    %v655 = vrot.slane %v623, 6
    %v656 = vrot.slane %v624, 6
    %v657 = vrot.slane %v625, 6
    %v658 = vrot.slane %v626, 6
    %v659 = vrot.slane %v627, 6
    %v660 = vrot.slane %v628, 6
    %v661 = vrot.slane %v629, 6
    %v662 = vrot.slane %v630, 6
    %v663 = vrot.slane %v631, 6
    %v664 = vrot.slane %v632, 6
    %v665 = vrot.slane %v633, 6
    %v666 = vrot.slane %v634, 6
    %v667 = vrot.slane %v635, 6
    %v668 = vrot.slane %v636, 6
    %v669 = vrot.slane %v637, 6
    %v670 = vrot.slane %v638, 6
    %v671 = vrot.slane %v639, 6
    %v672 = vrot.slane %v640, 6
    %v673 = vrot.slane %v641, 6
    %v674 = vrot.slane %v642, 6
    %v675 = vrot.slane %v643, 6
    %v676 = vrot.slane %v644, 6
    %v677 = vrot.slane %v645, 6
    %v678 = vrot.slane %v646, 6
    %v679 = vrot.slane %v647, 6
    %v680 = vrot.slane %v648, 6
    %v681 = vrot.slane %v649, 6
    %vm682 = vcmp.lt.s32.totalorder %v138, 2
    %v683 = vsel %vm682, %v680, %v681
    %v684 = vsel %vm682, %v679, %v680
    %v685 = vsel %vm682, %v678, %v679
    %v686 = vsel %vm682, %v677, %v678
    %v687 = vsel %vm682, %v676, %v677
    %v688 = vsel %vm682, %v675, %v676
    %v689 = vsel %vm682, %v674, %v675
    %v690 = vsel %vm682, %v673, %v674
    %v691 = vsel %vm682, %v672, %v673
    %v692 = vsel %vm682, %v671, %v672
    %v693 = vsel %vm682, %v670, %v671
    %v694 = vsel %vm682, %v669, %v670
    %v695 = vsel %vm682, %v668, %v669
    %v696 = vsel %vm682, %v667, %v668
    %v697 = vsel %vm682, %v666, %v667
    %v698 = vsel %vm682, %v665, %v666
    %v699 = vsel %vm682, %v664, %v665
    %v700 = vsel %vm682, %v663, %v664
    %v701 = vsel %vm682, %v662, %v663
    %v702 = vsel %vm682, %v661, %v662
    %v703 = vsel %vm682, %v660, %v661
    %v704 = vsel %vm682, %v659, %v660
    %v705 = vsel %vm682, %v658, %v659
    %v706 = vsel %vm682, %v657, %v658
    %v707 = vsel %vm682, %v656, %v657
    %v708 = vsel %vm682, %v655, %v656
    %v709 = vsel %vm682, %v654, %v655
    %v710 = vsel %vm682, %v653, %v654
    %v711 = vsel %vm682, %v652, %v653
    %v712 = vsel %vm682, %v651, %v652
    %v713 = vsel %vm682, %v650, %v651
    %v714 = vsel %vm682, %v681, %v650
    %v715 = vsel %vm554, 1, 0
    %v716 = vsel %vm555, 1, 0
    %v717 = vsel %vm556, 1, 0
    %v718 = vsel %vm557, 1, 0
    %v719 = vsel %vm558, 1, 0
    %v720 = vsel %vm559, 1, 0
    %v721 = vsel %vm560, 1, 0
    %v722 = vsel %vm561, 1, 0
    %v723 = vsel %vm562, 1, 0
    %v724 = vsel %vm563, 1, 0
    %v725 = vsel %vm564, 1, 0
    %v726 = vsel %vm565, 1, 0
    %v727 = vsel %vm566, 1, 0
    %v728 = vsel %vm567, 1, 0
    %v729 = vsel %vm568, 1, 0
    %v730 = vsel %vm569, 1, 0
    %v731 = vsel %vm570, 1, 0
    %v732 = vsel %vm571, 1, 0
    %v733 = vsel %vm572, 1, 0
    %v734 = vsel %vm573, 1, 0
    %v735 = vsel %vm574, 1, 0
    %v736 = vsel %vm575, 1, 0
    %v737 = vsel %vm576, 1, 0
    %v738 = vsel %vm577, 1, 0
    %v739 = vsel %vm578, 1, 0
    %v740 = vsel %vm579, 1, 0
    %v741 = vsel %vm580, 1, 0
    %v742 = vsel %vm581, 1, 0
    %v743 = vsel %vm582, 1, 0
    %v744 = vsel %vm583, 1, 0
    %v745 = vsel %vm584, 1, 0
    %v746 = vsel %vm585, 1, 0
    %vm747 = vcmp.eq.s32.totalorder %v715, 1
    %vm748 = vcmp.eq.s32.totalorder %v716, 1
    %vm749 = vcmp.eq.s32.totalorder %v717, 1
    %vm750 = vcmp.eq.s32.totalorder %v718, 1
    %vm751 = vcmp.eq.s32.totalorder %v719, 1
    %vm752 = vcmp.eq.s32.totalorder %v720, 1
    %vm753 = vcmp.eq.s32.totalorder %v721, 1
    %vm754 = vcmp.eq.s32.totalorder %v722, 1
    %vm755 = vcmp.eq.s32.totalorder %v723, 1
    %vm756 = vcmp.eq.s32.totalorder %v724, 1
    %vm757 = vcmp.eq.s32.totalorder %v725, 1
    %vm758 = vcmp.eq.s32.totalorder %v726, 1
    %vm759 = vcmp.eq.s32.totalorder %v727, 1
    %vm760 = vcmp.eq.s32.totalorder %v728, 1
    %vm761 = vcmp.eq.s32.totalorder %v729, 1
    %vm762 = vcmp.eq.s32.totalorder %v730, 1
    %vm763 = vcmp.eq.s32.totalorder %v731, 1
    %vm764 = vcmp.eq.s32.totalorder %v732, 1
    %vm765 = vcmp.eq.s32.totalorder %v733, 1
    %vm766 = vcmp.eq.s32.totalorder %v734, 1
    %vm767 = vcmp.eq.s32.totalorder %v735, 1
    %vm768 = vcmp.eq.s32.totalorder %v736, 1
    %vm769 = vcmp.eq.s32.totalorder %v737, 1
    %vm770 = vcmp.eq.s32.totalorder %v738, 1
    %vm771 = vcmp.eq.s32.totalorder %v739, 1
    %vm772 = vcmp.eq.s32.totalorder %v740, 1
    %vm773 = vcmp.eq.s32.totalorder %v741, 1
    %vm774 = vcmp.eq.s32.totalorder %v742, 1
    %vm775 = vcmp.eq.s32.totalorder %v743, 1
    %vm776 = vcmp.eq.s32.totalorder %v744, 1
    %vm777 = vcmp.eq.s32.totalorder %v745, 1
    %vm778 = vcmp.eq.s32.totalorder %v746, 1
    %v779 = vsel %vm747, %v714, 0.0
    %v780 = vsel %vm748, %v713, 0.0
    %v781 = vsel %vm749, %v712, 0.0
    %v782 = vsel %vm750, %v711, 0.0
    %v783 = vsel %vm751, %v710, 0.0
    %v784 = vsel %vm752, %v709, 0.0
    %v785 = vsel %vm753, %v708, 0.0
    %v786 = vsel %vm754, %v707, 0.0
    %v787 = vsel %vm755, %v706, 0.0
    %v788 = vsel %vm756, %v705, 0.0
    %v789 = vsel %vm757, %v704, 0.0
    %v790 = vsel %vm758, %v703, 0.0
    %v791 = vsel %vm759, %v702, 0.0
    %v792 = vsel %vm760, %v701, 0.0
    %v793 = vsel %vm761, %v700, 0.0
    %v794 = vsel %vm762, %v699, 0.0
    %v795 = vsel %vm763, %v698, 0.0
    %v796 = vsel %vm764, %v697, 0.0
    %v797 = vsel %vm765, %v696, 0.0
    %v798 = vsel %vm766, %v695, 0.0
    %v799 = vsel %vm767, %v694, 0.0
    %v800 = vsel %vm768, %v693, 0.0
    %v801 = vsel %vm769, %v692, 0.0
    %v802 = vsel %vm770, %v691, 0.0
    %v803 = vsel %vm771, %v690, 0.0
    %v804 = vsel %vm772, %v689, 0.0
    %v805 = vsel %vm773, %v688, 0.0
    %v806 = vsel %vm774, %v687, 0.0
    %v807 = vsel %vm775, %v686, 0.0
    %v808 = vsel %vm776, %v685, 0.0
    %v809 = vsel %vm777, %v684, 0.0
    %v810 = vsel %vm778, %v683, 0.0
    %v811 = vrot.slane %v618, 2
    %v812 = vrot.slane %v619, 2
    %v813 = vrot.slane %v620, 2
    %v814 = vrot.slane %v621, 2
    %v815 = vrot.slane %v622, 2
    %v816 = vrot.slane %v623, 2
    %v817 = vrot.slane %v624, 2
    %v818 = vrot.slane %v625, 2
    %v819 = vrot.slane %v626, 2
    %v820 = vrot.slane %v627, 2
    %v821 = vrot.slane %v628, 2
    %v822 = vrot.slane %v629, 2
    %v823 = vrot.slane %v630, 2
    %v824 = vrot.slane %v631, 2
    %v825 = vrot.slane %v632, 2
    %v826 = vrot.slane %v633, 2
    %v827 = vrot.slane %v634, 2
    %v828 = vrot.slane %v635, 2
    %v829 = vrot.slane %v636, 2
    %v830 = vrot.slane %v637, 2
    %v831 = vrot.slane %v638, 2
    %v832 = vrot.slane %v639, 2
    %v833 = vrot.slane %v640, 2
    %v834 = vrot.slane %v641, 2
    %v835 = vrot.slane %v642, 2
    %v836 = vrot.slane %v643, 2
    %v837 = vrot.slane %v644, 2
    %v838 = vrot.slane %v645, 2
    %v839 = vrot.slane %v646, 2
    %v840 = vrot.slane %v647, 2
    %v841 = vrot.slane %v648, 2
    %v842 = vrot.slane %v649, 2
    %vm843 = vcmp.lt.s32.totalorder %v138, 6
    %v844 = vsel %vm843, %v841, %v842
    %v845 = vsel %vm843, %v840, %v841
    %v846 = vsel %vm843, %v839, %v840
    %v847 = vsel %vm843, %v838, %v839
    %v848 = vsel %vm843, %v837, %v838
    %v849 = vsel %vm843, %v836, %v837
    %v850 = vsel %vm843, %v835, %v836
    %v851 = vsel %vm843, %v834, %v835
    %v852 = vsel %vm843, %v833, %v834
    %v853 = vsel %vm843, %v832, %v833
    %v854 = vsel %vm843, %v831, %v832
    %v855 = vsel %vm843, %v830, %v831
    %v856 = vsel %vm843, %v829, %v830
    %v857 = vsel %vm843, %v828, %v829
    %v858 = vsel %vm843, %v827, %v828
    %v859 = vsel %vm843, %v826, %v827
    %v860 = vsel %vm843, %v825, %v826
    %v861 = vsel %vm843, %v824, %v825
    %v862 = vsel %vm843, %v823, %v824
    %v863 = vsel %vm843, %v822, %v823
    %v864 = vsel %vm843, %v821, %v822
    %v865 = vsel %vm843, %v820, %v821
    %v866 = vsel %vm843, %v819, %v820
    %v867 = vsel %vm843, %v818, %v819
    %v868 = vsel %vm843, %v817, %v818
    %v869 = vsel %vm843, %v816, %v817
    %v870 = vsel %vm843, %v815, %v816
    %v871 = vsel %vm843, %v814, %v815
    %v872 = vsel %vm843, %v813, %v814
    %v873 = vsel %vm843, %v812, %v813
    %v874 = vsel %vm843, %v811, %v812
    %v875 = vsel %vm843, %v842, %v811
    %v876 = vsel %vm586, 1, 0
    %v877 = vsel %vm587, 1, 0
    %v878 = vsel %vm588, 1, 0
    %v879 = vsel %vm589, 1, 0
    %v880 = vsel %vm590, 1, 0
    %v881 = vsel %vm591, 1, 0
    %v882 = vsel %vm592, 1, 0
    %v883 = vsel %vm593, 1, 0
    %v884 = vsel %vm594, 1, 0
    %v885 = vsel %vm595, 1, 0
    %v886 = vsel %vm596, 1, 0
    %v887 = vsel %vm597, 1, 0
    %v888 = vsel %vm598, 1, 0
    %v889 = vsel %vm599, 1, 0
    %v890 = vsel %vm600, 1, 0
    %v891 = vsel %vm601, 1, 0
    %v892 = vsel %vm602, 1, 0
    %v893 = vsel %vm603, 1, 0
    %v894 = vsel %vm604, 1, 0
    %v895 = vsel %vm605, 1, 0
    %v896 = vsel %vm606, 1, 0
    %v897 = vsel %vm607, 1, 0
    %v898 = vsel %vm608, 1, 0
    %v899 = vsel %vm609, 1, 0
    %v900 = vsel %vm610, 1, 0
    %v901 = vsel %vm611, 1, 0
    %v902 = vsel %vm612, 1, 0
    %v903 = vsel %vm613, 1, 0
    %v904 = vsel %vm614, 1, 0
    %v905 = vsel %vm615, 1, 0
    %v906 = vsel %vm616, 1, 0
    %v907 = vsel %vm617, 1, 0
    %vm908 = vcmp.eq.s32.totalorder %v876, 1
    %vm909 = vcmp.eq.s32.totalorder %v877, 1
    %vm910 = vcmp.eq.s32.totalorder %v878, 1
    %vm911 = vcmp.eq.s32.totalorder %v879, 1
    %vm912 = vcmp.eq.s32.totalorder %v880, 1
    %vm913 = vcmp.eq.s32.totalorder %v881, 1
    %vm914 = vcmp.eq.s32.totalorder %v882, 1
    %vm915 = vcmp.eq.s32.totalorder %v883, 1
    %vm916 = vcmp.eq.s32.totalorder %v884, 1
    %vm917 = vcmp.eq.s32.totalorder %v885, 1
    %vm918 = vcmp.eq.s32.totalorder %v886, 1
    %vm919 = vcmp.eq.s32.totalorder %v887, 1
    %vm920 = vcmp.eq.s32.totalorder %v888, 1
    %vm921 = vcmp.eq.s32.totalorder %v889, 1
    %vm922 = vcmp.eq.s32.totalorder %v890, 1
    %vm923 = vcmp.eq.s32.totalorder %v891, 1
    %vm924 = vcmp.eq.s32.totalorder %v892, 1
    %vm925 = vcmp.eq.s32.totalorder %v893, 1
    %vm926 = vcmp.eq.s32.totalorder %v894, 1
    %vm927 = vcmp.eq.s32.totalorder %v895, 1
    %vm928 = vcmp.eq.s32.totalorder %v896, 1
    %vm929 = vcmp.eq.s32.totalorder %v897, 1
    %vm930 = vcmp.eq.s32.totalorder %v898, 1
    %vm931 = vcmp.eq.s32.totalorder %v899, 1
    %vm932 = vcmp.eq.s32.totalorder %v900, 1
    %vm933 = vcmp.eq.s32.totalorder %v901, 1
    %vm934 = vcmp.eq.s32.totalorder %v902, 1
    %vm935 = vcmp.eq.s32.totalorder %v903, 1
    %vm936 = vcmp.eq.s32.totalorder %v904, 1
    %vm937 = vcmp.eq.s32.totalorder %v905, 1
    %vm938 = vcmp.eq.s32.totalorder %v906, 1
    %vm939 = vcmp.eq.s32.totalorder %v907, 1
    %v940 = vsel %vm908, %v874, 0.0
    %v941 = vsel %vm909, %v873, 0.0
    %v942 = vsel %vm910, %v872, 0.0
    %v943 = vsel %vm911, %v871, 0.0
    %v944 = vsel %vm912, %v870, 0.0
    %v945 = vsel %vm913, %v869, 0.0
    %v946 = vsel %vm914, %v868, 0.0
    %v947 = vsel %vm915, %v867, 0.0
    %v948 = vsel %vm916, %v866, 0.0
    %v949 = vsel %vm917, %v865, 0.0
    %v950 = vsel %vm918, %v864, 0.0
    %v951 = vsel %vm919, %v863, 0.0
    %v952 = vsel %vm920, %v862, 0.0
    %v953 = vsel %vm921, %v861, 0.0
    %v954 = vsel %vm922, %v860, 0.0
    %v955 = vsel %vm923, %v859, 0.0
    %v956 = vsel %vm924, %v858, 0.0
    %v957 = vsel %vm925, %v857, 0.0
    %v958 = vsel %vm926, %v856, 0.0
    %v959 = vsel %vm927, %v855, 0.0
    %v960 = vsel %vm928, %v854, 0.0
    %v961 = vsel %vm929, %v853, 0.0
    %v962 = vsel %vm930, %v852, 0.0
    %v963 = vsel %vm931, %v851, 0.0
    %v964 = vsel %vm932, %v850, 0.0
    %v965 = vsel %vm933, %v849, 0.0
    %v966 = vsel %vm934, %v848, 0.0
    %v967 = vsel %vm935, %v847, 0.0
    %v968 = vsel %vm936, %v846, 0.0
    %v969 = vsel %vm937, %v845, 0.0
    %v970 = vsel %vm938, %v844, 0.0
    %v971 = vsel %vm939, %v875, 0.0
    %v972 = vpack.c.bf16 %v780, %v779
    %v973 = vpack.c.bf16 %v782, %v781
    %v974 = vpack.c.bf16 %v784, %v783
    %v975 = vpack.c.bf16 %v786, %v785
    %v976 = vpack.c.bf16 %v788, %v787
    %v977 = vpack.c.bf16 %v790, %v789
    %v978 = vpack.c.bf16 %v792, %v791
    %v979 = vpack.c.bf16 %v794, %v793
    %v980 = vpack.c.bf16 %v796, %v795
    %v981 = vpack.c.bf16 %v798, %v797
    %v982 = vpack.c.bf16 %v800, %v799
    %v983 = vpack.c.bf16 %v802, %v801
    %v984 = vpack.c.bf16 %v804, %v803
    %v985 = vpack.c.bf16 %v806, %v805
    %v986 = vpack.c.bf16 %v808, %v807
    %v987 = vpack.c.bf16 %v810, %v809
    %v988 = vpack.c.bf16 %v619, %v618
    %v989 = vpack.c.bf16 %v621, %v620
    %v990 = vpack.c.bf16 %v623, %v622
    %v991 = vpack.c.bf16 %v625, %v624
    %v992 = vpack.c.bf16 %v627, %v626
    %v993 = vpack.c.bf16 %v629, %v628
    %v994 = vpack.c.bf16 %v631, %v630
    %v995 = vpack.c.bf16 %v633, %v632
    %v996 = vpack.c.bf16 %v635, %v634
    %v997 = vpack.c.bf16 %v637, %v636
    %v998 = vpack.c.bf16 %v639, %v638
    %v999 = vpack.c.bf16 %v641, %v640
    %v1000 = vpack.c.bf16 %v643, %v642
    %v1001 = vpack.c.bf16 %v645, %v644
    %v1002 = vpack.c.bf16 %v647, %v646
    %v1003 = vpack.c.bf16 %v649, %v648
    %v1004 = vpack.c.bf16 %v941, %v940
    %v1005 = vpack.c.bf16 %v943, %v942
    %v1006 = vpack.c.bf16 %v945, %v944
    %v1007 = vpack.c.bf16 %v947, %v946
    %v1008 = vpack.c.bf16 %v949, %v948
    %v1009 = vpack.c.bf16 %v951, %v950
    %v1010 = vpack.c.bf16 %v953, %v952
    %v1011 = vpack.c.bf16 %v955, %v954
    %v1012 = vpack.c.bf16 %v957, %v956
    %v1013 = vpack.c.bf16 %v959, %v958
    %v1014 = vpack.c.bf16 %v961, %v960
    %v1015 = vpack.c.bf16 %v963, %v962
    %v1016 = vpack.c.bf16 %v965, %v964
    %v1017 = vpack.c.bf16 %v967, %v966
    %v1018 = vpack.c.bf16 %v969, %v968
    %v1019 = vpack.c.bf16 %v971, %v970
    %1036 = vrot.lane.b32.xlu0 %v988, 4
    %v1037 = vpop.permute.xlu0 %1036
    %1038 = vrot.lane.b32.xlu0 %v989, 4
    %v1039 = vpop.permute.xlu0 %1038
    %1040 = vrot.lane.b32.xlu0 %v990, 4
    %v1041 = vpop.permute.xlu0 %1040
    %1042 = vrot.lane.b32.xlu0 %v991, 4
    %v1043 = vpop.permute.xlu0 %1042
    %1044 = vrot.lane.b32.xlu0 %v992, 4
    %v1045 = vpop.permute.xlu0 %1044
    %1046 = vrot.lane.b32.xlu0 %v993, 4
    %v1047 = vpop.permute.xlu0 %1046
    %1048 = vrot.lane.b32.xlu0 %v994, 4
    %v1049 = vpop.permute.xlu0 %1048
    %1050 = vrot.lane.b32.xlu0 %v995, 4
    %v1051 = vpop.permute.xlu0 %1050
    %1052 = vrot.lane.b32.xlu0 %v996, 4
    %v1053 = vpop.permute.xlu0 %1052
    %1054 = vrot.lane.b32.xlu0 %v997, 4
    %v1055 = vpop.permute.xlu0 %1054
    %1056 = vrot.lane.b32.xlu0 %v998, 4
    %v1057 = vpop.permute.xlu0 %1056
    %1058 = vrot.lane.b32.xlu0 %v999, 4
    %v1059 = vpop.permute.xlu0 %1058
    %1060 = vrot.lane.b32.xlu0 %v1000, 4
    %v1061 = vpop.permute.xlu0 %1060
    %1062 = vrot.lane.b32.xlu0 %v1001, 4
    %v1063 = vpop.permute.xlu0 %1062
    %1064 = vrot.lane.b32.xlu0 %v1002, 4
    %v1065 = vpop.permute.xlu0 %1064
    %1066 = vrot.lane.b32.xlu0 %v1003, 4
    %v1067 = vpop.permute.xlu0 %1066
    %1084 = vrot.lane.b32.xlu0 %v1004, 8
    %v1085 = vpop.permute.xlu0 %1084
    %1086 = vrot.lane.b32.xlu0 %v1005, 8
    %v1087 = vpop.permute.xlu0 %1086
    %1088 = vrot.lane.b32.xlu0 %v1006, 8
    %v1089 = vpop.permute.xlu0 %1088
    %1090 = vrot.lane.b32.xlu0 %v1007, 8
    %v1091 = vpop.permute.xlu0 %1090
    %1092 = vrot.lane.b32.xlu0 %v1008, 8
    %v1093 = vpop.permute.xlu0 %1092
    %1094 = vrot.lane.b32.xlu0 %v1009, 8
    %v1095 = vpop.permute.xlu0 %1094
    %1096 = vrot.lane.b32.xlu0 %v1010, 8
    %v1097 = vpop.permute.xlu0 %1096
    %1098 = vrot.lane.b32.xlu0 %v1011, 8
    %v1099 = vpop.permute.xlu0 %1098
    %1100 = vrot.lane.b32.xlu0 %v1012, 8
    %v1101 = vpop.permute.xlu0 %1100
    %1102 = vrot.lane.b32.xlu0 %v1013, 8
    %v1103 = vpop.permute.xlu0 %1102
    %1104 = vrot.lane.b32.xlu0 %v1014, 8
    %v1105 = vpop.permute.xlu0 %1104
    %1106 = vrot.lane.b32.xlu0 %v1015, 8
    %v1107 = vpop.permute.xlu0 %1106
    %1108 = vrot.lane.b32.xlu0 %v1016, 8
    %v1109 = vpop.permute.xlu0 %1108
    %1110 = vrot.lane.b32.xlu0 %v1017, 8
    %v1111 = vpop.permute.xlu0 %1110
    %1112 = vrot.lane.b32.xlu0 %v1018, 8
    %v1113 = vpop.permute.xlu0 %1112
    %1114 = vrot.lane.b32.xlu0 %v1019, 8
    %v1115 = vpop.permute.xlu0 %1114
    %vm1116 = vcmask 31744
    %v1119 = vsel %vm1116, %v972, %v1037
    %v1122 = vsel %vm1116, %v973, %v1039
    %v1125 = vsel %vm1116, %v974, %v1041
    %v1128 = vsel %vm1116, %v975, %v1043
    %v1131 = vsel %vm1116, %v976, %v1045
    %v1134 = vsel %vm1116, %v977, %v1047
    %v1137 = vsel %vm1116, %v978, %v1049
    %v1140 = vsel %vm1116, %v979, %v1051
    %v1143 = vsel %vm1116, %v980, %v1053
    %v1146 = vsel %vm1116, %v981, %v1055
    %v1149 = vsel %vm1116, %v982, %v1057
    %v1152 = vsel %vm1116, %v983, %v1059
    %v1155 = vsel %vm1116, %v984, %v1061
    %v1158 = vsel %vm1116, %v985, %v1063
    %v1161 = vsel %vm1116, %v986, %v1065
    %v1164 = vsel %vm1116, %v987, %v1067
    %vm1165 = vcmask 64512
    %v1167 = vsel %vm1165, %v1119, %v1085
    %v1169 = vsel %vm1165, %v1122, %v1087
    %v1171 = vsel %vm1165, %v1125, %v1089
    %v1173 = vsel %vm1165, %v1128, %v1091
    %v1175 = vsel %vm1165, %v1131, %v1093
    %v1177 = vsel %vm1165, %v1134, %v1095
    %v1179 = vsel %vm1165, %v1137, %v1097
    %v1181 = vsel %vm1165, %v1140, %v1099
    %v1183 = vsel %vm1165, %v1143, %v1101
    %v1185 = vsel %vm1165, %v1146, %v1103
    %v1187 = vsel %vm1165, %v1149, %v1105
    %v1189 = vsel %vm1165, %v1152, %v1107
    %v1191 = vsel %vm1165, %v1155, %v1109
    %v1193 = vsel %vm1165, %v1158, %v1111
    %v1195 = vsel %vm1165, %v1161, %v1113
    %v1197 = vsel %vm1165, %v1164, %v1115
    %v1198 = vld [vmem:[#allocation6] sm:$0xf]
    %v1199 = vld [vmem:[#allocation6 + $0x4] sm:$0x3]
    %v1200 = vld [vmem:[#allocation8] sm:$0x1]
    %v1202 = vlaneseq
    %v1203 = vshrl.u32 %v1202, 7
    %v1204 = vsub.s32 0, %v1203
    %v1205 = vrot.slane %v1200, %v1204
    %v1209 = vunpack.c.l.b16 %v1198
    %v1210 = vunpack.c.l.b16 %v1199
    %v1211 = vpack.c.b16 %v1210, %v1209
    %vm1212 = vcmask 97280
    %v1213 = vsel %vm1212, %v1167, 0
    %v1215 = vsel %vm1212, %v1169, 0
    %v1217 = vsel %vm1212, %v1171, 0
    %v1219 = vsel %vm1212, %v1173, 0
    %v1221 = vsel %vm1212, %v1175, 0
    %v1223 = vsel %vm1212, %v1177, 0
    %v1225 = vsel %vm1212, %v1179, 0
    %v1227 = vsel %vm1212, %v1181, 0
    %v1229 = vsel %vm1212, %v1183, 0
    %v1231 = vsel %vm1212, %v1185, 0
    %v1233 = vsel %vm1212, %v1187, 0
    %v1235 = vsel %vm1212, %v1189, 0
    %v1237 = vsel %vm1212, %v1191, 0
    %v1239 = vsel %vm1212, %v1193, 0
    %v1241 = vsel %vm1212, %v1195, 0
    %v1243 = vsel %vm1212, %v1197, 0
    %vm1245 = vcmask 1045504
    %v1247 = vsel %vm1245, %v1211, 0
    %1249 = vmatprep.subr.bf16.mxu0 0
    %1250 = vmatpush1.bf16.msra.mxu0 %v1247
    %1251 = vmatprep.subr.bf16.mxu0 0
    %1252 = vmatpush1.bf16.msra.mxu0 0
    %1253 = vmatprep.subr.bf16.mxu0 0
    %1254 = vmatpush1.bf16.msra.mxu0 0
    %1255 = vmatprep.subr.bf16.mxu0 0
    %1256 = vmatpush1.bf16.msra.mxu0 0
    %1257 = vmatprep.subr.bf16.mxu0 0
    %1258 = vmatpush1.bf16.msra.mxu0 0
    %1259 = vmatprep.subr.bf16.mxu0 0
    %1260 = vmatpush1.bf16.msra.mxu0 0
    %1261 = vmatprep.subr.bf16.mxu0 0
    %1262 = vmatpush1.bf16.msra.mxu0 0
    %1263 = vmatprep.subr.bf16.mxu0 0
    %1264 = vmatpush1.bf16.msra.mxu0 0
    %1265 = vmatprep.subr.bf16.mxu0 0
    %1266 = vmatpush1.bf16.msra.mxu0 0
    %1267 = vmatprep.subr.bf16.mxu0 0
    %1268 = vmatpush1.bf16.msra.mxu0 0
    %1269 = vmatprep.subr.bf16.mxu0 0
    %1270 = vmatpush1.bf16.msra.mxu0 0
    %1271 = vmatprep.subr.bf16.mxu0 0
    %1272 = vmatpush1.bf16.msra.mxu0 0
    %1273 = vmatprep.subr.bf16.mxu0 0
    %1274 = vmatpush1.bf16.msra.mxu0 0
    %1275 = vmatprep.subr.bf16.mxu0 0
    %1276 = vmatpush1.bf16.msra.mxu0 0
    %1277 = vmatprep.subr.bf16.mxu0 0
    %1278 = vmatpush1.bf16.msra.mxu0 0
    %1279 = vmatprep.subr.bf16.mxu0 0
    %1280 = vmatpush1.bf16.msra.mxu0 0
    %1281 = vmatprep.mubr.bf16.mxu0 0
    %1282 = vmatmul.mubr.bf16.gmra.mrb[0].mxu0 %v1213
    %v1283 = vpop.f32.mrb[0].mxu0
    %v1284 = vadd.f32 %v1205, %v1283
    %v1285 = vpop.f32.mrb[0].mxu0
    %v1286 = vpop.f32.mrb[0].mxu0
    %v1287 = vadd.f32 %v1205, %v1286
    %v1288 = vpop.f32.mrb[0].mxu0
    %1289 = vmatprep.mubr.bf16.mxu0 0
    %1290 = vmatmul.mubr.bf16.gmra.mrb[0].mxu0 %v1215
    %v1291 = vpop.f32.mrb[0].mxu0
    %v1292 = vadd.f32 %v1205, %v1291
    %v1293 = vpop.f32.mrb[0].mxu0
    %v1294 = vpop.f32.mrb[0].mxu0
    %v1295 = vadd.f32 %v1205, %v1294
    %v1296 = vpop.f32.mrb[0].mxu0
    %1297 = vmatprep.mubr.bf16.mxu0 0
    %1298 = vmatmul.mubr.bf16.gmra.mrb[0].mxu0 %v1217
    %v1299 = vpop.f32.mrb[0].mxu0
    %v1300 = vadd.f32 %v1205, %v1299
    %v1301 = vpop.f32.mrb[0].mxu0
    %v1302 = vpop.f32.mrb[0].mxu0
    %v1303 = vadd.f32 %v1205, %v1302
    %v1304 = vpop.f32.mrb[0].mxu0
    %1305 = vmatprep.mubr.bf16.mxu0 0
    %1306 = vmatmul.mubr.bf16.gmra.mrb[0].mxu0 %v1219
    %v1307 = vpop.f32.mrb[0].mxu0
    %v1308 = vadd.f32 %v1205, %v1307
    %v1309 = vpop.f32.mrb[0].mxu0
    %v1310 = vpop.f32.mrb[0].mxu0
    %v1311 = vadd.f32 %v1205, %v1310
    %v1312 = vpop.f32.mrb[0].mxu0
    %1313 = vmatprep.mubr.bf16.mxu0 0
    %1314 = vmatmul.mubr.bf16.gmra.mrb[0].mxu0 %v1221
    %v1315 = vpop.f32.mrb[0].mxu0
    %v1316 = vadd.f32 %v1205, %v1315
    %v1317 = vpop.f32.mrb[0].mxu0
    %v1318 = vpop.f32.mrb[0].mxu0
    %v1319 = vadd.f32 %v1205, %v1318
    %v1320 = vpop.f32.mrb[0].mxu0
    %1321 = vmatprep.mubr.bf16.mxu0 0
    %1322 = vmatmul.mubr.bf16.gmra.mrb[0].mxu0 %v1223
    %v1323 = vpop.f32.mrb[0].mxu0
    %v1324 = vadd.f32 %v1205, %v1323
    %v1325 = vpop.f32.mrb[0].mxu0
    %v1326 = vpop.f32.mrb[0].mxu0
    %v1327 = vadd.f32 %v1205, %v1326
    %v1328 = vpop.f32.mrb[0].mxu0
    %1329 = vmatprep.mubr.bf16.mxu0 0
    %1330 = vmatmul.mubr.bf16.gmra.mrb[0].mxu0 %v1225
    %v1331 = vpop.f32.mrb[0].mxu0
    %v1332 = vadd.f32 %v1205, %v1331
    %v1333 = vpop.f32.mrb[0].mxu0
    %v1334 = vpop.f32.mrb[0].mxu0
    %v1335 = vadd.f32 %v1205, %v1334
    %v1336 = vpop.f32.mrb[0].mxu0
    %1337 = vmatprep.mubr.bf16.mxu0 0
    %1338 = vmatmul.mubr.bf16.gmra.mrb[0].mxu0 %v1227
    %v1339 = vpop.f32.mrb[0].mxu0
    %v1340 = vadd.f32 %v1205, %v1339
    %v1341 = vpop.f32.mrb[0].mxu0
    %v1342 = vpop.f32.mrb[0].mxu0
    %v1343 = vadd.f32 %v1205, %v1342
    %v1344 = vpop.f32.mrb[0].mxu0
    %1345 = vmatprep.mubr.bf16.mxu0 0
    %1346 = vmatmul.mubr.bf16.gmra.mrb[0].mxu0 %v1229
    %v1347 = vpop.f32.mrb[0].mxu0
    %v1348 = vadd.f32 %v1205, %v1347
    %v1349 = vpop.f32.mrb[0].mxu0
    %v1350 = vpop.f32.mrb[0].mxu0
    %v1351 = vadd.f32 %v1205, %v1350
    %v1352 = vpop.f32.mrb[0].mxu0
    %1353 = vmatprep.mubr.bf16.mxu0 0
    %1354 = vmatmul.mubr.bf16.gmra.mrb[0].mxu0 %v1231
    %v1355 = vpop.f32.mrb[0].mxu0
    %v1356 = vadd.f32 %v1205, %v1355
    %v1357 = vpop.f32.mrb[0].mxu0
    %v1358 = vpop.f32.mrb[0].mxu0
    %v1359 = vadd.f32 %v1205, %v1358
    %v1360 = vpop.f32.mrb[0].mxu0
    %1361 = vmatprep.mubr.bf16.mxu0 0
    %1362 = vmatmul.mubr.bf16.gmra.mrb[0].mxu0 %v1233
    %v1363 = vpop.f32.mrb[0].mxu0
    %v1364 = vadd.f32 %v1205, %v1363
    %v1365 = vpop.f32.mrb[0].mxu0
    %v1366 = vpop.f32.mrb[0].mxu0
    %v1367 = vadd.f32 %v1205, %v1366
    %v1368 = vpop.f32.mrb[0].mxu0
    %1369 = vmatprep.mubr.bf16.mxu0 0
    %1370 = vmatmul.mubr.bf16.gmra.mrb[0].mxu0 %v1235
    %v1371 = vpop.f32.mrb[0].mxu0
    %v1372 = vadd.f32 %v1205, %v1371
    %v1373 = vpop.f32.mrb[0].mxu0
    %v1374 = vpop.f32.mrb[0].mxu0
    %v1375 = vadd.f32 %v1205, %v1374
    %v1376 = vpop.f32.mrb[0].mxu0
    %1377 = vmatprep.mubr.bf16.mxu0 0
    %1378 = vmatmul.mubr.bf16.gmra.mrb[0].mxu0 %v1237
    %v1379 = vpop.f32.mrb[0].mxu0
    %v1380 = vadd.f32 %v1205, %v1379
    %v1381 = vpop.f32.mrb[0].mxu0
    %v1382 = vpop.f32.mrb[0].mxu0
    %v1383 = vadd.f32 %v1205, %v1382
    %v1384 = vpop.f32.mrb[0].mxu0
    %1385 = vmatprep.mubr.bf16.mxu0 0
    %1386 = vmatmul.mubr.bf16.gmra.mrb[0].mxu0 %v1239
    %v1387 = vpop.f32.mrb[0].mxu0
    %v1388 = vadd.f32 %v1205, %v1387
    %v1389 = vpop.f32.mrb[0].mxu0
    %v1390 = vpop.f32.mrb[0].mxu0
    %v1391 = vadd.f32 %v1205, %v1390
    %v1392 = vpop.f32.mrb[0].mxu0
    %1393 = vmatprep.mubr.bf16.mxu0 0
    %1394 = vmatmul.mubr.bf16.gmra.mrb[0].mxu0 %v1241
    %v1395 = vpop.f32.mrb[0].mxu0
    %v1396 = vadd.f32 %v1205, %v1395
    %v1397 = vpop.f32.mrb[0].mxu0
    %v1398 = vpop.f32.mrb[0].mxu0
    %v1399 = vadd.f32 %v1205, %v1398
    %v1400 = vpop.f32.mrb[0].mxu0
    %1401 = vmatprep.mubr.bf16.mxu0 0
    %1402 = vmatmul.mubr.bf16.gmra.mrb[0].mxu0 %v1243
    %v1403 = vpop.f32.mrb[0].mxu0
    %v1404 = vadd.f32 %v1205, %v1403
    %v1405 = vpop.f32.mrb[0].mxu0
    %v1406 = vpop.f32.mrb[0].mxu0
    %v1407 = vadd.f32 %v1205, %v1406
    %v1408 = vpop.f32.mrb[0].mxu0
    %1409 = vdwg.mxu0
    %v1410 = vmax.f32 %v1284, 0.0
    %v1411 = vmax.f32 %v1287, 0.0
    %v1412 = vmax.f32 %v1292, 0.0
    %v1413 = vmax.f32 %v1295, 0.0
    %v1414 = vmax.f32 %v1300, 0.0
    %v1415 = vmax.f32 %v1303, 0.0
    %v1416 = vmax.f32 %v1308, 0.0
    %v1417 = vmax.f32 %v1311, 0.0
    %v1418 = vmax.f32 %v1316, 0.0
    %v1419 = vmax.f32 %v1319, 0.0
    %v1420 = vmax.f32 %v1324, 0.0
    %v1421 = vmax.f32 %v1327, 0.0
    %v1422 = vmax.f32 %v1332, 0.0
    %v1423 = vmax.f32 %v1335, 0.0
    %v1424 = vmax.f32 %v1340, 0.0
    %v1425 = vmax.f32 %v1343, 0.0
    %v1426 = vmax.f32 %v1348, 0.0
    %v1427 = vmax.f32 %v1351, 0.0
    %v1428 = vmax.f32 %v1356, 0.0
    %v1429 = vmax.f32 %v1359, 0.0
    %v1430 = vmax.f32 %v1364, 0.0
    %v1431 = vmax.f32 %v1367, 0.0
    %v1432 = vmax.f32 %v1372, 0.0
    %v1433 = vmax.f32 %v1375, 0.0
    %v1434 = vmax.f32 %v1380, 0.0
    %v1435 = vmax.f32 %v1383, 0.0
    %v1436 = vmax.f32 %v1388, 0.0
    %v1437 = vmax.f32 %v1391, 0.0
    %v1438 = vmax.f32 %v1396, 0.0
    %v1439 = vmax.f32 %v1399, 0.0
    %v1440 = vmax.f32 %v1404, 0.0
    %v1441 = vmax.f32 %v1407, 0.0
    %v1442 = vrot.slane %v1410, 6
    %v1443 = vrot.slane %v1411, 6
    %v1444 = vrot.slane %v1412, 6
    %v1445 = vrot.slane %v1413, 6
    %v1446 = vrot.slane %v1414, 6
    %v1447 = vrot.slane %v1415, 6
    %v1448 = vrot.slane %v1416, 6
    %v1449 = vrot.slane %v1417, 6
    %v1450 = vrot.slane %v1418, 6
    %v1451 = vrot.slane %v1419, 6
    %v1452 = vrot.slane %v1420, 6
    %v1453 = vrot.slane %v1421, 6
    %v1454 = vrot.slane %v1422, 6
    %v1455 = vrot.slane %v1423, 6
    %v1456 = vrot.slane %v1424, 6
    %v1457 = vrot.slane %v1425, 6
    %v1458 = vrot.slane %v1426, 6
    %v1459 = vrot.slane %v1427, 6
    %v1460 = vrot.slane %v1428, 6
    %v1461 = vrot.slane %v1429, 6
    %v1462 = vrot.slane %v1430, 6
    %v1463 = vrot.slane %v1431, 6
    %v1464 = vrot.slane %v1432, 6
    %v1465 = vrot.slane %v1433, 6
    %v1466 = vrot.slane %v1434, 6
    %v1467 = vrot.slane %v1435, 6
    %v1468 = vrot.slane %v1436, 6
    %v1469 = vrot.slane %v1437, 6
    %v1470 = vrot.slane %v1438, 6
    %v1471 = vrot.slane %v1439, 6
    %v1472 = vrot.slane %v1440, 6
    %v1473 = vrot.slane %v1441, 6
    %v1474 = vsel %vm682, %v1472, %v1473
    %v1475 = vsel %vm682, %v1471, %v1472
    %v1476 = vsel %vm682, %v1470, %v1471
    %v1477 = vsel %vm682, %v1469, %v1470
    %v1478 = vsel %vm682, %v1468, %v1469
    %v1479 = vsel %vm682, %v1467, %v1468
    %v1480 = vsel %vm682, %v1466, %v1467
    %v1481 = vsel %vm682, %v1465, %v1466
    %v1482 = vsel %vm682, %v1464, %v1465
    %v1483 = vsel %vm682, %v1463, %v1464
    %v1484 = vsel %vm682, %v1462, %v1463
    %v1485 = vsel %vm682, %v1461, %v1462
    %v1486 = vsel %vm682, %v1460, %v1461
    %v1487 = vsel %vm682, %v1459, %v1460
    %v1488 = vsel %vm682, %v1458, %v1459
    %v1489 = vsel %vm682, %v1457, %v1458
    %v1490 = vsel %vm682, %v1456, %v1457
    %v1491 = vsel %vm682, %v1455, %v1456
    %v1492 = vsel %vm682, %v1454, %v1455
    %v1493 = vsel %vm682, %v1453, %v1454
    %v1494 = vsel %vm682, %v1452, %v1453
    %v1495 = vsel %vm682, %v1451, %v1452
    %v1496 = vsel %vm682, %v1450, %v1451
    %v1497 = vsel %vm682, %v1449, %v1450
    %v1498 = vsel %vm682, %v1448, %v1449
    %v1499 = vsel %vm682, %v1447, %v1448
    %v1500 = vsel %vm682, %v1446, %v1447
    %v1501 = vsel %vm682, %v1445, %v1446
    %v1502 = vsel %vm682, %v1444, %v1445
    %v1503 = vsel %vm682, %v1443, %v1444
    %v1504 = vsel %vm682, %v1442, %v1443
    %v1505 = vsel %vm682, %v1473, %v1442
    %v1506 = vsel %vm747, %v1505, 0.0
    %v1507 = vsel %vm748, %v1504, 0.0
    %v1508 = vsel %vm749, %v1503, 0.0
    %v1509 = vsel %vm750, %v1502, 0.0
    %v1510 = vsel %vm751, %v1501, 0.0
    %v1511 = vsel %vm752, %v1500, 0.0
    %v1512 = vsel %vm753, %v1499, 0.0
    %v1513 = vsel %vm754, %v1498, 0.0
    %v1514 = vsel %vm755, %v1497, 0.0
    %v1515 = vsel %vm756, %v1496, 0.0
    %v1516 = vsel %vm757, %v1495, 0.0
    %v1517 = vsel %vm758, %v1494, 0.0
    %v1518 = vsel %vm759, %v1493, 0.0
    %v1519 = vsel %vm760, %v1492, 0.0
    %v1520 = vsel %vm761, %v1491, 0.0
    %v1521 = vsel %vm762, %v1490, 0.0
    %v1522 = vsel %vm763, %v1489, 0.0
    %v1523 = vsel %vm764, %v1488, 0.0
    %v1524 = vsel %vm765, %v1487, 0.0
    %v1525 = vsel %vm766, %v1486, 0.0
    %v1526 = vsel %vm767, %v1485, 0.0
    %v1527 = vsel %vm768, %v1484, 0.0
    %v1528 = vsel %vm769, %v1483, 0.0
    %v1529 = vsel %vm770, %v1482, 0.0
    %v1530 = vsel %vm771, %v1481, 0.0
    %v1531 = vsel %vm772, %v1480, 0.0
    %v1532 = vsel %vm773, %v1479, 0.0
    %v1533 = vsel %vm774, %v1478, 0.0
    %v1534 = vsel %vm775, %v1477, 0.0
    %v1535 = vsel %vm776, %v1476, 0.0
    %v1536 = vsel %vm777, %v1475, 0.0
    %v1537 = vsel %vm778, %v1474, 0.0
    %v1538 = vrot.slane %v1410, 2
    %v1539 = vrot.slane %v1411, 2
    %v1540 = vrot.slane %v1412, 2
    %v1541 = vrot.slane %v1413, 2
    %v1542 = vrot.slane %v1414, 2
    %v1543 = vrot.slane %v1415, 2
    %v1544 = vrot.slane %v1416, 2
    %v1545 = vrot.slane %v1417, 2
    %v1546 = vrot.slane %v1418, 2
    %v1547 = vrot.slane %v1419, 2
    %v1548 = vrot.slane %v1420, 2
    %v1549 = vrot.slane %v1421, 2
    %v1550 = vrot.slane %v1422, 2
    %v1551 = vrot.slane %v1423, 2
    %v1552 = vrot.slane %v1424, 2
    %v1553 = vrot.slane %v1425, 2
    %v1554 = vrot.slane %v1426, 2
    %v1555 = vrot.slane %v1427, 2
    %v1556 = vrot.slane %v1428, 2
    %v1557 = vrot.slane %v1429, 2
    %v1558 = vrot.slane %v1430, 2
    %v1559 = vrot.slane %v1431, 2
    %v1560 = vrot.slane %v1432, 2
    %v1561 = vrot.slane %v1433, 2
    %v1562 = vrot.slane %v1434, 2
    %v1563 = vrot.slane %v1435, 2
    %v1564 = vrot.slane %v1436, 2
    %v1565 = vrot.slane %v1437, 2
    %v1566 = vrot.slane %v1438, 2
    %v1567 = vrot.slane %v1439, 2
    %v1568 = vrot.slane %v1440, 2
    %v1569 = vrot.slane %v1441, 2
    %v1570 = vsel %vm843, %v1568, %v1569
    %v1571 = vsel %vm843, %v1567, %v1568
    %v1572 = vsel %vm843, %v1566, %v1567
    %v1573 = vsel %vm843, %v1565, %v1566
    %v1574 = vsel %vm843, %v1564, %v1565
    %v1575 = vsel %vm843, %v1563, %v1564
    %v1576 = vsel %vm843, %v1562, %v1563
    %v1577 = vsel %vm843, %v1561, %v1562
    %v1578 = vsel %vm843, %v1560, %v1561
    %v1579 = vsel %vm843, %v1559, %v1560
    %v1580 = vsel %vm843, %v1558, %v1559
    %v1581 = vsel %vm843, %v1557, %v1558
    %v1582 = vsel %vm843, %v1556, %v1557
    %v1583 = vsel %vm843, %v1555, %v1556
    %v1584 = vsel %vm843, %v1554, %v1555
    %v1585 = vsel %vm843, %v1553, %v1554
    %v1586 = vsel %vm843, %v1552, %v1553
    %v1587 = vsel %vm843, %v1551, %v1552
    %v1588 = vsel %vm843, %v1550, %v1551
    %v1589 = vsel %vm843, %v1549, %v1550
    %v1590 = vsel %vm843, %v1548, %v1549
    %v1591 = vsel %vm843, %v1547, %v1548
    %v1592 = vsel %vm843, %v1546, %v1547
    %v1593 = vsel %vm843, %v1545, %v1546
    %v1594 = vsel %vm843, %v1544, %v1545
    %v1595 = vsel %vm843, %v1543, %v1544
    %v1596 = vsel %vm843, %v1542, %v1543
    %v1597 = vsel %vm843, %v1541, %v1542
    %v1598 = vsel %vm843, %v1540, %v1541
    %v1599 = vsel %vm843, %v1539, %v1540
    %v1600 = vsel %vm843, %v1538, %v1539
    %v1601 = vsel %vm843, %v1569, %v1538
    %v1602 = vsel %vm908, %v1600, 0.0
    %v1603 = vsel %vm909, %v1599, 0.0
    %v1604 = vsel %vm910, %v1598, 0.0
    %v1605 = vsel %vm911, %v1597, 0.0
    %v1606 = vsel %vm912, %v1596, 0.0
    %v1607 = vsel %vm913, %v1595, 0.0
    %v1608 = vsel %vm914, %v1594, 0.0
    %v1609 = vsel %vm915, %v1593, 0.0
    %v1610 = vsel %vm916, %v1592, 0.0
    %v1611 = vsel %vm917, %v1591, 0.0
    %v1612 = vsel %vm918, %v1590, 0.0
    %v1613 = vsel %vm919, %v1589, 0.0
    %v1614 = vsel %vm920, %v1588, 0.0
    %v1615 = vsel %vm921, %v1587, 0.0
    %v1616 = vsel %vm922, %v1586, 0.0
    %v1617 = vsel %vm923, %v1585, 0.0
    %v1618 = vsel %vm924, %v1584, 0.0
    %v1619 = vsel %vm925, %v1583, 0.0
    %v1620 = vsel %vm926, %v1582, 0.0
    %v1621 = vsel %vm927, %v1581, 0.0
    %v1622 = vsel %vm928, %v1580, 0.0
    %v1623 = vsel %vm929, %v1579, 0.0
    %v1624 = vsel %vm930, %v1578, 0.0
    %v1625 = vsel %vm931, %v1577, 0.0
    %v1626 = vsel %vm932, %v1576, 0.0
    %v1627 = vsel %vm933, %v1575, 0.0
    %v1628 = vsel %vm934, %v1574, 0.0
    %v1629 = vsel %vm935, %v1573, 0.0
    %v1630 = vsel %vm936, %v1572, 0.0
    %v1631 = vsel %vm937, %v1571, 0.0
    %v1632 = vsel %vm938, %v1570, 0.0
    %v1633 = vsel %vm939, %v1601, 0.0
    %v1634 = vpack.c.bf16 %v1507, %v1506
    %v1635 = vpack.c.bf16 %v1509, %v1508
    %v1636 = vpack.c.bf16 %v1511, %v1510
    %v1637 = vpack.c.bf16 %v1513, %v1512
    %v1638 = vpack.c.bf16 %v1515, %v1514
    %v1639 = vpack.c.bf16 %v1517, %v1516
    %v1640 = vpack.c.bf16 %v1519, %v1518
    %v1641 = vpack.c.bf16 %v1521, %v1520
    %v1642 = vpack.c.bf16 %v1523, %v1522
    %v1643 = vpack.c.bf16 %v1525, %v1524
    %v1644 = vpack.c.bf16 %v1527, %v1526
    %v1645 = vpack.c.bf16 %v1529, %v1528
    %v1646 = vpack.c.bf16 %v1531, %v1530
    %v1647 = vpack.c.bf16 %v1533, %v1532
    %v1648 = vpack.c.bf16 %v1535, %v1534
    %v1649 = vpack.c.bf16 %v1537, %v1536
    %v1650 = vpack.c.bf16 %v1411, %v1410
    %v1651 = vpack.c.bf16 %v1413, %v1412
    %v1652 = vpack.c.bf16 %v1415, %v1414
    %v1653 = vpack.c.bf16 %v1417, %v1416
    %v1654 = vpack.c.bf16 %v1419, %v1418
    %v1655 = vpack.c.bf16 %v1421, %v1420
    %v1656 = vpack.c.bf16 %v1423, %v1422
    %v1657 = vpack.c.bf16 %v1425, %v1424
    %v1658 = vpack.c.bf16 %v1427, %v1426
    %v1659 = vpack.c.bf16 %v1429, %v1428
    %v1660 = vpack.c.bf16 %v1431, %v1430
    %v1661 = vpack.c.bf16 %v1433, %v1432
    %v1662 = vpack.c.bf16 %v1435, %v1434
    %v1663 = vpack.c.bf16 %v1437, %v1436
    %v1664 = vpack.c.bf16 %v1439, %v1438
    %v1665 = vpack.c.bf16 %v1441, %v1440
    %v1666 = vpack.c.bf16 %v1603, %v1602
    %v1667 = vpack.c.bf16 %v1605, %v1604
    %v1668 = vpack.c.bf16 %v1607, %v1606
    %v1669 = vpack.c.bf16 %v1609, %v1608
    %v1670 = vpack.c.bf16 %v1611, %v1610
    %v1671 = vpack.c.bf16 %v1613, %v1612
    %v1672 = vpack.c.bf16 %v1615, %v1614
    %v1673 = vpack.c.bf16 %v1617, %v1616
    %v1674 = vpack.c.bf16 %v1619, %v1618
    %v1675 = vpack.c.bf16 %v1621, %v1620
    %v1676 = vpack.c.bf16 %v1623, %v1622
    %v1677 = vpack.c.bf16 %v1625, %v1624
    %v1678 = vpack.c.bf16 %v1627, %v1626
    %v1679 = vpack.c.bf16 %v1629, %v1628
    %v1680 = vpack.c.bf16 %v1631, %v1630
    %v1681 = vpack.c.bf16 %v1633, %v1632
    %1698 = vrot.lane.b32.xlu0 %v1650, 64
    %v1699 = vpop.permute.xlu0 %1698
    %1700 = vrot.lane.b32.xlu0 %v1651, 64
    %v1701 = vpop.permute.xlu0 %1700
    %1702 = vrot.lane.b32.xlu0 %v1652, 64
    %v1703 = vpop.permute.xlu0 %1702
    %1704 = vrot.lane.b32.xlu0 %v1653, 64
    %v1705 = vpop.permute.xlu0 %1704
    %1706 = vrot.lane.b32.xlu0 %v1654, 64
    %v1707 = vpop.permute.xlu0 %1706
    %1708 = vrot.lane.b32.xlu0 %v1655, 64
    %v1709 = vpop.permute.xlu0 %1708
    %1710 = vrot.lane.b32.xlu0 %v1656, 64
    %v1711 = vpop.permute.xlu0 %1710
    %1712 = vrot.lane.b32.xlu0 %v1657, 64
    %v1713 = vpop.permute.xlu0 %1712
    %1714 = vrot.lane.b32.xlu0 %v1658, 64
    %v1715 = vpop.permute.xlu0 %1714
    %1716 = vrot.lane.b32.xlu0 %v1659, 64
    %v1717 = vpop.permute.xlu0 %1716
    %1718 = vrot.lane.b32.xlu0 %v1660, 64
    %v1719 = vpop.permute.xlu0 %1718
    %1720 = vrot.lane.b32.xlu0 %v1661, 64
    %v1721 = vpop.permute.xlu0 %1720
    %1722 = vrot.lane.b32.xlu0 %v1662, 64
    %v1723 = vpop.permute.xlu0 %1722
    %1724 = vrot.lane.b32.xlu0 %v1663, 64
    %v1725 = vpop.permute.xlu0 %1724
    %1726 = vrot.lane.b32.xlu0 %v1664, 64
    %v1727 = vpop.permute.xlu0 %1726
    %1728 = vrot.lane.b32.xlu0 %v1665, 64
    %v1729 = vpop.permute.xlu0 %1728
    %vm1730 = vcmask 523264
    %v1733 = vsel %vm1730, %v1634, %v1699
    %v1737 = vsel %vm1730, %v1635, %v1701
    %v1741 = vsel %vm1730, %v1636, %v1703
    %v1745 = vsel %vm1730, %v1637, %v1705
    %v1749 = vsel %vm1730, %v1638, %v1707
    %v1753 = vsel %vm1730, %v1639, %v1709
    %v1757 = vsel %vm1730, %v1640, %v1711
    %v1761 = vsel %vm1730, %v1641, %v1713
    %v1765 = vsel %vm1730, %v1642, %v1715
    %v1769 = vsel %vm1730, %v1643, %v1717
    %v1773 = vsel %vm1730, %v1644, %v1719
    %v1777 = vsel %vm1730, %v1645, %v1721
    %v1781 = vsel %vm1730, %v1646, %v1723
    %v1785 = vsel %vm1730, %v1647, %v1725
    %v1789 = vsel %vm1730, %v1648, %v1727
    %v1793 = vsel %vm1730, %v1649, %v1729
    %v1795 = vld [vmem:[#allocation9] sm:$0xf]
    %v1796 = vld [vmem:[#allocation9 + $0x4] sm:$0xf]
    %v1797 = vld [vmem:[#allocation9 + $0x8] sm:$0xf]
    %v1798 = vld [vmem:[#allocation9 + $0xc] sm:$0xf]
    %v1799 = vld [vmem:[#allocation9 + $0x10] sm:$0xf]
    %v1800 = vld [vmem:[#allocation9 + $0x14] sm:$0xf]
    %v1801 = vld [vmem:[#allocation9 + $0x18] sm:$0xf]
    %v1802 = vld [vmem:[#allocation9 + $0x1c] sm:$0xf]
    %v1803 = vld [vmem:[#allocation9 + $0x20] sm:$0xf]
    %v1804 = vld [vmem:[#allocation9 + $0x24] sm:$0xf]
    %v1805 = vld [vmem:[#allocation9 + $0x28] sm:$0xf]
    %v1806 = vld [vmem:[#allocation9 + $0x2c] sm:$0xf]
    %v1807 = vld [vmem:[#allocation9 + $0x30] sm:$0xf]
    %v1808 = vld [vmem:[#allocation9 + $0x34] sm:$0xf]
    %v1809 = vld [vmem:[#allocation9 + $0x38] sm:$0xf]
    %v1810 = vld [vmem:[#allocation9 + $0x3c] sm:$0xf]
    %v1811 = vld [vmem:[#allocation9 + $0x40] sm:$0xf]
    %v1812 = vld [vmem:[#allocation9 + $0x44] sm:$0xf]
    %v1813 = vld [vmem:[#allocation9 + $0x48] sm:$0xf]
    %v1814 = vld [vmem:[#allocation9 + $0x4c] sm:$0xf]
    %v1815 = vld [vmem:[#allocation9 + $0x50] sm:$0xf]
    %v1816 = vld [vmem:[#allocation9 + $0x54] sm:$0xf]
    %v1817 = vld [vmem:[#allocation9 + $0x58] sm:$0xf]
    %v1818 = vld [vmem:[#allocation9 + $0x5c] sm:$0xf]
    %v1819 = vld [vmem:[#allocation11] sm:$0x1]
    %v1821 = vlaneseq
    %v1822 = vshrl.u32 %v1821, 7
    %v1823 = vsub.s32 0, %v1822
    %v1824 = vrot.slane %v1819, %v1823
    %v1850 = vunpack.c.l.b16 %v1795
    %v1851 = vunpack.c.l.b16 %v1796
    %v1852 = vunpack.c.l.b16 %v1797
    %v1853 = vunpack.c.l.b16 %v1798
    %v1854 = vunpack.c.l.b16 %v1799
    %v1855 = vunpack.c.l.b16 %v1800
    %v1856 = vunpack.c.l.b16 %v1801
    %v1857 = vunpack.c.l.b16 %v1802
    %v1858 = vunpack.c.l.b16 %v1803
    %v1859 = vunpack.c.l.b16 %v1804
    %v1860 = vunpack.c.l.b16 %v1805
    %v1861 = vunpack.c.l.b16 %v1806
    %v1862 = vunpack.c.l.b16 %v1807
    %v1863 = vunpack.c.l.b16 %v1808
    %v1864 = vunpack.c.l.b16 %v1809
    %v1865 = vunpack.c.l.b16 %v1810
    %v1866 = vunpack.c.l.b16 %v1811
    %v1867 = vunpack.c.l.b16 %v1812
    %v1868 = vunpack.c.l.b16 %v1813
    %v1869 = vunpack.c.l.b16 %v1814
    %v1870 = vunpack.c.l.b16 %v1815
    %v1871 = vunpack.c.l.b16 %v1816
    %v1872 = vunpack.c.l.b16 %v1817
    %v1873 = vunpack.c.l.b16 %v1818
    %v1874 = vpack.c.b16 %v1851, %v1850
    %v1875 = vpack.c.b16 %v1853, %v1852
    %v1876 = vpack.c.b16 %v1855, %v1854
    %v1877 = vpack.c.b16 %v1857, %v1856
    %v1878 = vpack.c.b16 %v1859, %v1858
    %v1879 = vpack.c.b16 %v1861, %v1860
    %v1880 = vpack.c.b16 %v1863, %v1862
    %v1881 = vpack.c.b16 %v1865, %v1864
    %v1882 = vpack.c.b16 %v1867, %v1866
    %v1883 = vpack.c.b16 %v1869, %v1868
    %v1884 = vpack.c.b16 %v1871, %v1870
    %v1885 = vpack.c.b16 %v1873, %v1872
    %v1899 = vsel %vm1730, %v1666, 0
    %v1902 = vsel %vm1730, %v1667, 0
    %v1905 = vsel %vm1730, %v1668, 0
    %v1908 = vsel %vm1730, %v1669, 0
    %v1911 = vsel %vm1730, %v1670, 0
    %v1914 = vsel %vm1730, %v1671, 0
    %v1917 = vsel %vm1730, %v1672, 0
    %v1920 = vsel %vm1730, %v1673, 0
    %v1923 = vsel %vm1730, %v1674, 0
    %v1926 = vsel %vm1730, %v1675, 0
    %v1929 = vsel %vm1730, %v1676, 0
    %v1932 = vsel %vm1730, %v1677, 0
    %v1935 = vsel %vm1730, %v1678, 0
    %v1938 = vsel %vm1730, %v1679, 0
    %v1941 = vsel %vm1730, %v1680, 0
    %v1944 = vsel %vm1730, %v1681, 0
    %1946 = vmatprep.subr.bf16.mxu0 0
    %1947 = vmatpush1.bf16.msra.mxu0 %v1874
    %1948 = vmatprep.subr.bf16.mxu0 0
    %1949 = vmatpush1.bf16.msra.mxu0 %v1875
    %1950 = vmatprep.subr.bf16.mxu0 0
    %1951 = vmatpush1.bf16.msra.mxu0 %v1876
    %1952 = vmatprep.subr.bf16.mxu0 0
    %1953 = vmatpush1.bf16.msra.mxu0 %v1877
    %1954 = vmatprep.subr.bf16.mxu0 0
    %1955 = vmatpush1.bf16.msra.mxu0 %v1878
    %1956 = vmatprep.subr.bf16.mxu0 0
    %1957 = vmatpush1.bf16.msra.mxu0 %v1879
    %1958 = vmatprep.subr.bf16.mxu0 0
    %1959 = vmatpush1.bf16.msra.mxu0 %v1880
    %1960 = vmatprep.subr.bf16.mxu0 0
    %1961 = vmatpush1.bf16.msra.mxu0 %v1881
    %1962 = vmatprep.subr.bf16.mxu0 0
    %1963 = vmatpush1.bf16.msra.mxu0 %v1882
    %1964 = vmatprep.subr.bf16.mxu0 0
    %1965 = vmatpush1.bf16.msra.mxu0 %v1883
    %1966 = vmatprep.subr.bf16.mxu0 0
    %1967 = vmatpush1.bf16.msra.mxu0 %v1884
    %1968 = vmatprep.subr.bf16.mxu0 0
    %1969 = vmatpush1.bf16.msra.mxu0 %v1885
    %1970 = vmatprep.subr.bf16.mxu0 0
    %1971 = vmatpush1.bf16.msra.mxu0 0
    %1972 = vmatprep.subr.bf16.mxu0 0
    %1973 = vmatpush1.bf16.msra.mxu0 0
    %1974 = vmatprep.subr.bf16.mxu0 0
    %1975 = vmatpush1.bf16.msra.mxu0 0
    %1976 = vmatprep.subr.bf16.mxu0 0
    %1977 = vmatpush1.bf16.msra.mxu0 0
    %1978 = vmatprep.mubr.bf16.mxu0 %v1899
    %1979 = vmatmul.mubr.bf16.gmra.mrb[0].mxu0 %v1733
    %v1980 = vpop.f32.mrb[0].mxu0
    %v1981 = vadd.f32 %v1824, %v1980
    %v1982 = vpop.f32.mrb[0].mxu0
    %v1983 = vpop.f32.mrb[0].mxu0
    %v1984 = vadd.f32 %v1824, %v1983
    %v1985 = vpop.f32.mrb[0].mxu0
    %1986 = vmatprep.mubr.bf16.mxu0 %v1902
    %1987 = vmatmul.mubr.bf16.gmra.mrb[0].mxu0 %v1737
    %v1988 = vpop.f32.mrb[0].mxu0
    %v1989 = vadd.f32 %v1824, %v1988
    %v1990 = vpop.f32.mrb[0].mxu0
    %v1991 = vpop.f32.mrb[0].mxu0
    %v1992 = vadd.f32 %v1824, %v1991
    %v1993 = vpop.f32.mrb[0].mxu0
    %1994 = vmatprep.mubr.bf16.mxu0 %v1905
    %1995 = vmatmul.mubr.bf16.gmra.mrb[0].mxu0 %v1741
    %v1996 = vpop.f32.mrb[0].mxu0
    %v1997 = vadd.f32 %v1824, %v1996
    %v1998 = vpop.f32.mrb[0].mxu0
    %v1999 = vpop.f32.mrb[0].mxu0
    %v2000 = vadd.f32 %v1824, %v1999
    %v2001 = vpop.f32.mrb[0].mxu0
    %2002 = vmatprep.mubr.bf16.mxu0 %v1908
    %2003 = vmatmul.mubr.bf16.gmra.mrb[0].mxu0 %v1745
    %v2004 = vpop.f32.mrb[0].mxu0
    %v2005 = vadd.f32 %v1824, %v2004
    %v2006 = vpop.f32.mrb[0].mxu0
    %v2007 = vpop.f32.mrb[0].mxu0
    %v2008 = vadd.f32 %v1824, %v2007
    %v2009 = vpop.f32.mrb[0].mxu0
    %2010 = vmatprep.mubr.bf16.mxu0 %v1911
    %2011 = vmatmul.mubr.bf16.gmra.mrb[0].mxu0 %v1749
    %v2012 = vpop.f32.mrb[0].mxu0
    %v2013 = vadd.f32 %v1824, %v2012
    %v2014 = vpop.f32.mrb[0].mxu0
    %v2015 = vpop.f32.mrb[0].mxu0
    %v2016 = vadd.f32 %v1824, %v2015
    %v2017 = vpop.f32.mrb[0].mxu0
    %2018 = vmatprep.mubr.bf16.mxu0 %v1914
    %2019 = vmatmul.mubr.bf16.gmra.mrb[0].mxu0 %v1753
    %v2020 = vpop.f32.mrb[0].mxu0
    %v2021 = vadd.f32 %v1824, %v2020
    %v2022 = vpop.f32.mrb[0].mxu0
    %v2023 = vpop.f32.mrb[0].mxu0
    %v2024 = vadd.f32 %v1824, %v2023
    %v2025 = vpop.f32.mrb[0].mxu0
    %2026 = vmatprep.mubr.bf16.mxu0 %v1917
    %2027 = vmatmul.mubr.bf16.gmra.mrb[0].mxu0 %v1757
    %v2028 = vpop.f32.mrb[0].mxu0
    %v2029 = vadd.f32 %v1824, %v2028
    %v2030 = vpop.f32.mrb[0].mxu0
    %v2031 = vpop.f32.mrb[0].mxu0
    %v2032 = vadd.f32 %v1824, %v2031
    %v2033 = vpop.f32.mrb[0].mxu0
    %2034 = vmatprep.mubr.bf16.mxu0 %v1920
    %2035 = vmatmul.mubr.bf16.gmra.mrb[0].mxu0 %v1761
    %v2036 = vpop.f32.mrb[0].mxu0
    %v2037 = vadd.f32 %v1824, %v2036
    %v2038 = vpop.f32.mrb[0].mxu0
    %v2039 = vpop.f32.mrb[0].mxu0
    %v2040 = vadd.f32 %v1824, %v2039
    %v2041 = vpop.f32.mrb[0].mxu0
    %2042 = vmatprep.mubr.bf16.mxu0 %v1923
    %2043 = vmatmul.mubr.bf16.gmra.mrb[0].mxu0 %v1765
    %v2044 = vpop.f32.mrb[0].mxu0
    %v2045 = vadd.f32 %v1824, %v2044
    %v2046 = vpop.f32.mrb[0].mxu0
    %v2047 = vpop.f32.mrb[0].mxu0
    %v2048 = vadd.f32 %v1824, %v2047
    %v2049 = vpop.f32.mrb[0].mxu0
    %2050 = vmatprep.mubr.bf16.mxu0 %v1926
    %2051 = vmatmul.mubr.bf16.gmra.mrb[0].mxu0 %v1769
    %v2052 = vpop.f32.mrb[0].mxu0
    %v2053 = vadd.f32 %v1824, %v2052
    %v2054 = vpop.f32.mrb[0].mxu0
    %v2055 = vpop.f32.mrb[0].mxu0
    %v2056 = vadd.f32 %v1824, %v2055
    %v2057 = vpop.f32.mrb[0].mxu0
    %2058 = vmatprep.mubr.bf16.mxu0 %v1929
    %2059 = vmatmul.mubr.bf16.gmra.mrb[0].mxu0 %v1773
    %v2060 = vpop.f32.mrb[0].mxu0
    %v2061 = vadd.f32 %v1824, %v2060
    %v2062 = vpop.f32.mrb[0].mxu0
    %v2063 = vpop.f32.mrb[0].mxu0
    %v2064 = vadd.f32 %v1824, %v2063
    %v2065 = vpop.f32.mrb[0].mxu0
    %2066 = vmatprep.mubr.bf16.mxu0 %v1932
    %2067 = vmatmul.mubr.bf16.gmra.mrb[0].mxu0 %v1777
    %v2068 = vpop.f32.mrb[0].mxu0
    %v2069 = vadd.f32 %v1824, %v2068
    %v2070 = vpop.f32.mrb[0].mxu0
    %v2071 = vpop.f32.mrb[0].mxu0
    %v2072 = vadd.f32 %v1824, %v2071
    %v2073 = vpop.f32.mrb[0].mxu0
    %2074 = vmatprep.mubr.bf16.mxu0 %v1935
    %2075 = vmatmul.mubr.bf16.gmra.mrb[0].mxu0 %v1781
    %v2076 = vpop.f32.mrb[0].mxu0
    %v2077 = vadd.f32 %v1824, %v2076
    %v2078 = vpop.f32.mrb[0].mxu0
    %v2079 = vpop.f32.mrb[0].mxu0
    %v2080 = vadd.f32 %v1824, %v2079
    %v2081 = vpop.f32.mrb[0].mxu0
    %2082 = vmatprep.mubr.bf16.mxu0 %v1938
    %2083 = vmatmul.mubr.bf16.gmra.mrb[0].mxu0 %v1785
    %v2084 = vpop.f32.mrb[0].mxu0
    %v2085 = vadd.f32 %v1824, %v2084
    %v2086 = vpop.f32.mrb[0].mxu0
    %v2087 = vpop.f32.mrb[0].mxu0
    %v2088 = vadd.f32 %v1824, %v2087
    %v2089 = vpop.f32.mrb[0].mxu0
    %2090 = vmatprep.mubr.bf16.mxu0 %v1941
    %2091 = vmatmul.mubr.bf16.gmra.mrb[0].mxu0 %v1789
    %v2092 = vpop.f32.mrb[0].mxu0
    %v2093 = vadd.f32 %v1824, %v2092
    %v2094 = vpop.f32.mrb[0].mxu0
    %v2095 = vpop.f32.mrb[0].mxu0
    %v2096 = vadd.f32 %v1824, %v2095
    %v2097 = vpop.f32.mrb[0].mxu0
    %2098 = vmatprep.mubr.bf16.mxu0 %v1944
    %2099 = vmatmul.mubr.bf16.gmra.mrb[0].mxu0 %v1793
    %v2100 = vpop.f32.mrb[0].mxu0
    %v2101 = vadd.f32 %v1824, %v2100
    %v2102 = vpop.f32.mrb[0].mxu0
    %v2103 = vpop.f32.mrb[0].mxu0
    %v2104 = vadd.f32 %v1824, %v2103
    %v2105 = vpop.f32.mrb[0].mxu0
    %2106 = vdwg.mxu0
    %v2107 = vmax.f32 %v1981, 0.0
    %v2108 = vmax.f32 %v1984, 0.0
    %v2109 = vmax.f32 %v1989, 0.0
    %v2110 = vmax.f32 %v1992, 0.0
    %v2111 = vmax.f32 %v1997, 0.0
    %v2112 = vmax.f32 %v2000, 0.0
    %v2113 = vmax.f32 %v2005, 0.0
    %v2114 = vmax.f32 %v2008, 0.0
    %v2115 = vmax.f32 %v2013, 0.0
    %v2116 = vmax.f32 %v2016, 0.0
    %v2117 = vmax.f32 %v2021, 0.0
    %v2118 = vmax.f32 %v2024, 0.0
    %v2119 = vmax.f32 %v2029, 0.0
    %v2120 = vmax.f32 %v2032, 0.0
    %v2121 = vmax.f32 %v2037, 0.0
    %v2122 = vmax.f32 %v2040, 0.0
    %v2123 = vmax.f32 %v2045, 0.0
    %v2124 = vmax.f32 %v2048, 0.0
    %v2125 = vmax.f32 %v2053, 0.0
    %v2126 = vmax.f32 %v2056, 0.0
    %v2127 = vmax.f32 %v2061, 0.0
    %v2128 = vmax.f32 %v2064, 0.0
    %v2129 = vmax.f32 %v2069, 0.0
    %v2130 = vmax.f32 %v2072, 0.0
    %v2131 = vmax.f32 %v2077, 0.0
    %v2132 = vmax.f32 %v2080, 0.0
    %v2133 = vmax.f32 %v2085, 0.0
    %v2134 = vmax.f32 %v2088, 0.0
    %v2135 = vmax.f32 %v2093, 0.0
    %v2136 = vmax.f32 %v2096, 0.0
    %v2137 = vmax.f32 %v2101, 0.0
    %v2138 = vmax.f32 %v2104, 0.0
    %v2139 = vsel %vm1730, %v2107, 0.0
    %v2140 = vsel %vm1730, %v2108, 0.0
    %v2141 = vadd.f32 %v2139, %v2140
    %v2142 = vrot.slane %v2141, 4
    %v2143 = vadd.f32 %v2141, %v2142
    %v2144 = vrot.slane %v2143, 2
    %v2145 = vadd.f32 %v2143, %v2144
    %v2146 = vrot.slane %v2145, 1
    %v2147 = vadd.f32 %v2145, %v2146
    %v2148 = vsel %vm1730, %v2109, 0.0
    %v2149 = vsel %vm1730, %v2110, 0.0
    %v2150 = vadd.f32 %v2148, %v2149
    %v2151 = vrot.slane %v2150, 4
    %v2152 = vadd.f32 %v2150, %v2151
    %v2153 = vrot.slane %v2152, 2
    %v2154 = vadd.f32 %v2152, %v2153
    %v2155 = vrot.slane %v2154, 1
    %v2156 = vadd.f32 %v2154, %v2155
    %v2157 = vsel %vm1730, %v2111, 0.0
    %v2158 = vsel %vm1730, %v2112, 0.0
    %v2159 = vadd.f32 %v2157, %v2158
    %v2160 = vrot.slane %v2159, 4
    %v2161 = vadd.f32 %v2159, %v2160
    %v2162 = vrot.slane %v2161, 2
    %v2163 = vadd.f32 %v2161, %v2162
    %v2164 = vrot.slane %v2163, 1
    %v2165 = vadd.f32 %v2163, %v2164
    %v2166 = vsel %vm1730, %v2113, 0.0
    %v2167 = vsel %vm1730, %v2114, 0.0
    %v2168 = vadd.f32 %v2166, %v2167
    %v2169 = vrot.slane %v2168, 4
    %v2170 = vadd.f32 %v2168, %v2169
    %v2171 = vrot.slane %v2170, 2
    %v2172 = vadd.f32 %v2170, %v2171
    %v2173 = vrot.slane %v2172, 1
    %v2174 = vadd.f32 %v2172, %v2173
    %v2175 = vsel %vm1730, %v2115, 0.0
    %v2176 = vsel %vm1730, %v2116, 0.0
    %v2177 = vadd.f32 %v2175, %v2176
    %v2178 = vrot.slane %v2177, 4
    %v2179 = vadd.f32 %v2177, %v2178
    %v2180 = vrot.slane %v2179, 2
    %v2181 = vadd.f32 %v2179, %v2180
    %v2182 = vrot.slane %v2181, 1
    %v2183 = vadd.f32 %v2181, %v2182
    %v2184 = vsel %vm1730, %v2117, 0.0
    %v2185 = vsel %vm1730, %v2118, 0.0
    %v2186 = vadd.f32 %v2184, %v2185
    %v2187 = vrot.slane %v2186, 4
    %v2188 = vadd.f32 %v2186, %v2187
    %v2189 = vrot.slane %v2188, 2
    %v2190 = vadd.f32 %v2188, %v2189
    %v2191 = vrot.slane %v2190, 1
    %v2192 = vadd.f32 %v2190, %v2191
    %v2193 = vsel %vm1730, %v2119, 0.0
    %v2194 = vsel %vm1730, %v2120, 0.0
    %v2195 = vadd.f32 %v2193, %v2194
    %v2196 = vrot.slane %v2195, 4
    %v2197 = vadd.f32 %v2195, %v2196
    %v2198 = vrot.slane %v2197, 2
    %v2199 = vadd.f32 %v2197, %v2198
    %v2200 = vrot.slane %v2199, 1
    %v2201 = vadd.f32 %v2199, %v2200
    %v2202 = vsel %vm1730, %v2121, 0.0
    %v2203 = vsel %vm1730, %v2122, 0.0
    %v2204 = vadd.f32 %v2202, %v2203
    %v2205 = vrot.slane %v2204, 4
    %v2206 = vadd.f32 %v2204, %v2205
    %v2207 = vrot.slane %v2206, 2
    %v2208 = vadd.f32 %v2206, %v2207
    %v2209 = vrot.slane %v2208, 1
    %v2210 = vadd.f32 %v2208, %v2209
    %v2211 = vsel %vm1730, %v2123, 0.0
    %v2212 = vsel %vm1730, %v2124, 0.0
    %v2213 = vadd.f32 %v2211, %v2212
    %v2214 = vrot.slane %v2213, 4
    %v2215 = vadd.f32 %v2213, %v2214
    %v2216 = vrot.slane %v2215, 2
    %v2217 = vadd.f32 %v2215, %v2216
    %v2218 = vrot.slane %v2217, 1
    %v2219 = vadd.f32 %v2217, %v2218
    %v2220 = vsel %vm1730, %v2125, 0.0
    %v2221 = vsel %vm1730, %v2126, 0.0
    %v2222 = vadd.f32 %v2220, %v2221
    %v2223 = vrot.slane %v2222, 4
    %v2224 = vadd.f32 %v2222, %v2223
    %v2225 = vrot.slane %v2224, 2
    %v2226 = vadd.f32 %v2224, %v2225
    %v2227 = vrot.slane %v2226, 1
    %v2228 = vadd.f32 %v2226, %v2227
    %v2229 = vsel %vm1730, %v2127, 0.0
    %v2230 = vsel %vm1730, %v2128, 0.0
    %v2231 = vadd.f32 %v2229, %v2230
    %v2232 = vrot.slane %v2231, 4
    %v2233 = vadd.f32 %v2231, %v2232
    %v2234 = vrot.slane %v2233, 2
    %v2235 = vadd.f32 %v2233, %v2234
    %v2236 = vrot.slane %v2235, 1
    %v2237 = vadd.f32 %v2235, %v2236
    %v2238 = vsel %vm1730, %v2129, 0.0
    %v2239 = vsel %vm1730, %v2130, 0.0
    %v2240 = vadd.f32 %v2238, %v2239
    %v2241 = vrot.slane %v2240, 4
    %v2242 = vadd.f32 %v2240, %v2241
    %v2243 = vrot.slane %v2242, 2
    %v2244 = vadd.f32 %v2242, %v2243
    %v2245 = vrot.slane %v2244, 1
    %v2246 = vadd.f32 %v2244, %v2245
    %v2247 = vsel %vm1730, %v2131, 0.0
    %v2248 = vsel %vm1730, %v2132, 0.0
    %v2249 = vadd.f32 %v2247, %v2248
    %v2250 = vrot.slane %v2249, 4
    %v2251 = vadd.f32 %v2249, %v2250
    %v2252 = vrot.slane %v2251, 2
    %v2253 = vadd.f32 %v2251, %v2252
    %v2254 = vrot.slane %v2253, 1
    %v2255 = vadd.f32 %v2253, %v2254
    %v2256 = vsel %vm1730, %v2133, 0.0
    %v2257 = vsel %vm1730, %v2134, 0.0
    %v2258 = vadd.f32 %v2256, %v2257
    %v2259 = vrot.slane %v2258, 4
    %v2260 = vadd.f32 %v2258, %v2259
    %v2261 = vrot.slane %v2260, 2
    %v2262 = vadd.f32 %v2260, %v2261
    %v2263 = vrot.slane %v2262, 1
    %v2264 = vadd.f32 %v2262, %v2263
    %v2265 = vsel %vm1730, %v2135, 0.0
    %v2266 = vsel %vm1730, %v2136, 0.0
    %v2267 = vadd.f32 %v2265, %v2266
    %v2268 = vrot.slane %v2267, 4
    %v2269 = vadd.f32 %v2267, %v2268
    %v2270 = vrot.slane %v2269, 2
    %v2271 = vadd.f32 %v2269, %v2270
    %v2272 = vrot.slane %v2271, 1
    %v2273 = vadd.f32 %v2271, %v2272
    %v2274 = vsel %vm1730, %v2137, 0.0
    %v2275 = vsel %vm1730, %v2138, 0.0
    %v2276 = vadd.f32 %v2274, %v2275
    %v2277 = vrot.slane %v2276, 4
    %v2278 = vadd.f32 %v2276, %v2277
    %v2279 = vrot.slane %v2278, 2
    %v2280 = vadd.f32 %v2278, %v2279
    %v2281 = vrot.slane %v2280, 1
    %v2282 = vadd.f32 %v2280, %v2281
    %v2283 = vmul.f32 %v2147, 0.0625
    %v2284 = vmul.f32 %v2156, 0.0625
    %v2285 = vmul.f32 %v2165, 0.0625
    %v2286 = vmul.f32 %v2174, 0.0625
    %v2287 = vmul.f32 %v2183, 0.0625
    %v2288 = vmul.f32 %v2192, 0.0625
    %v2289 = vmul.f32 %v2201, 0.0625
    %v2290 = vmul.f32 %v2210, 0.0625
    %v2291 = vmul.f32 %v2219, 0.0625
    %v2292 = vmul.f32 %v2228, 0.0625
    %v2293 = vmul.f32 %v2237, 0.0625
    %v2294 = vmul.f32 %v2246, 0.0625
    %v2295 = vmul.f32 %v2255, 0.0625
    %v2296 = vmul.f32 %v2264, 0.0625
    %v2297 = vmul.f32 %v2273, 0.0625
    %v2298 = vmul.f32 %v2282, 0.0625
    %v2299 = vpack.c.bf16 %v2283, %v2283
    %v2300 = vpack.c.bf16 %v2284, %v2284
    %v2301 = vpack.c.bf16 %v2285, %v2285
    %v2302 = vpack.c.bf16 %v2286, %v2286
    %v2303 = vpack.c.bf16 %v2287, %v2287
    %v2304 = vpack.c.bf16 %v2288, %v2288
    %v2305 = vpack.c.bf16 %v2289, %v2289
    %v2306 = vpack.c.bf16 %v2290, %v2290
    %v2307 = vpack.c.bf16 %v2291, %v2291
    %v2308 = vpack.c.bf16 %v2292, %v2292
    %v2309 = vpack.c.bf16 %v2293, %v2293
    %v2310 = vpack.c.bf16 %v2294, %v2294
    %v2311 = vpack.c.bf16 %v2295, %v2295
    %v2312 = vpack.c.bf16 %v2296, %v2296
    %v2313 = vpack.c.bf16 %v2297, %v2297
    %v2314 = vpack.c.bf16 %v2298, %v2298
    %v2315 = vld [vmem:[#allocation12] sm:$0xf]
    %v2316 = vld [vmem:[#allocation12 + $0x4] sm:$0xf]
    %v2317 = vld [vmem:[#allocation12 + $0x8] sm:$0xf]
    %v2318 = vld [vmem:[#allocation12 + $0xc] sm:$0xf]
    %v2319 = vld [vmem:[#allocation12 + $0x10] sm:$0xf]
    %v2320 = vld [vmem:[#allocation12 + $0x14] sm:$0xf]
    %v2321 = vld [vmem:[#allocation12 + $0x18] sm:$0xf]
    %v2322 = vld [vmem:[#allocation12 + $0x1c] sm:$0xf]
    %v2323 = vld [vmem:[#allocation14] sm:$0x1]
    %v2325 = vlaneseq
    %v2326 = vshrl.u32 %v2325, 7
    %v2327 = vsub.s32 0, %v2326
    %v2328 = vrot.slane %v2323, %v2327
    %v2346 = vunpack.c.l.b16 %v2299
    %v2347 = vunpack.c.l.b16 %v2300
    %v2348 = vunpack.c.l.b16 %v2301
    %v2349 = vunpack.c.l.b16 %v2302
    %v2350 = vunpack.c.l.b16 %v2303
    %v2351 = vunpack.c.l.b16 %v2304
    %v2352 = vunpack.c.l.b16 %v2305
    %v2353 = vunpack.c.l.b16 %v2306
    %v2354 = vunpack.c.l.b16 %v2307
    %v2355 = vunpack.c.l.b16 %v2308
    %v2356 = vunpack.c.l.b16 %v2309
    %v2357 = vunpack.c.l.b16 %v2310
    %v2358 = vunpack.c.l.b16 %v2311
    %v2359 = vunpack.c.l.b16 %v2312
    %v2360 = vunpack.c.l.b16 %v2313
    %v2361 = vunpack.c.l.b16 %v2314
    %vm2362 = vcmask 1041409
    %v2363 = vsel %vm2362, %v2347, %v2346
    %vm2364 = vcmask 1042434
    %v2365 = vsel %vm2364, %v2348, %v2363
    %vm2366 = vcmask 1043459
    %v2367 = vsel %vm2366, %v2349, %v2365
    %vm2368 = vcmask 1044484
    %v2369 = vsel %vm2368, %v2350, %v2367
    %vm2370 = vcmask 1045509
    %v2371 = vsel %vm2370, %v2351, %v2369
    %vm2372 = vcmask 1046534
    %v2373 = vsel %vm2372, %v2352, %v2371
    %vm2374 = vcmask 1047559
    %v2375 = vsel %vm2374, %v2353, %v2373
    %v2376 = vsel %vm2362, %v2355, %v2354
    %v2377 = vsel %vm2364, %v2356, %v2376
    %v2378 = vsel %vm2366, %v2357, %v2377
    %v2379 = vsel %vm2368, %v2358, %v2378
    %v2380 = vsel %vm2370, %v2359, %v2379
    %v2381 = vsel %vm2372, %v2360, %v2380
    %v2382 = vsel %vm2374, %v2361, %v2381
    %v2383 = vpack.c.b16 %v2382, %v2375
    %v2392 = vunpack.c.l.b16 %v2315
    %v2393 = vunpack.c.l.b16 %v2316
    %v2394 = vunpack.c.l.b16 %v2317
    %v2395 = vunpack.c.l.b16 %v2318
    %v2396 = vunpack.c.l.b16 %v2319
    %v2397 = vunpack.c.l.b16 %v2320
    %v2398 = vunpack.c.l.b16 %v2321
    %v2399 = vunpack.c.l.b16 %v2322
    %v2400 = vpack.c.b16 %v2393, %v2392
    %v2401 = vpack.c.b16 %v2395, %v2394
    %v2402 = vpack.c.b16 %v2397, %v2396
    %v2403 = vpack.c.b16 %v2399, %v2398
    %v2409 = vsel %vm1730, %v2383, 0
    %2411 = vmatprep.subr.bf16.mxu0 0
    %2412 = vmatpush1.bf16.msra.mxu0 %v2400
    %2413 = vmatprep.subr.bf16.mxu0 0
    %2414 = vmatpush1.bf16.msra.mxu0 %v2401
    %2415 = vmatprep.subr.bf16.mxu0 0
    %2416 = vmatpush1.bf16.msra.mxu0 %v2402
    %2417 = vmatprep.subr.bf16.mxu0 0
    %2418 = vmatpush1.bf16.msra.mxu0 %v2403
    %2419 = vmatprep.subr.bf16.mxu0 0
    %2420 = vmatpush1.bf16.msra.mxu0 0
    %2421 = vmatprep.subr.bf16.mxu0 0
    %2422 = vmatpush1.bf16.msra.mxu0 0
    %2423 = vmatprep.subr.bf16.mxu0 0
    %2424 = vmatpush1.bf16.msra.mxu0 0
    %2425 = vmatprep.subr.bf16.mxu0 0
    %2426 = vmatpush1.bf16.msra.mxu0 0
    %2427 = vmatprep.subr.bf16.mxu0 0
    %2428 = vmatpush1.bf16.msra.mxu0 0
    %2429 = vmatprep.subr.bf16.mxu0 0
    %2430 = vmatpush1.bf16.msra.mxu0 0
    %2431 = vmatprep.subr.bf16.mxu0 0
    %2432 = vmatpush1.bf16.msra.mxu0 0
    %2433 = vmatprep.subr.bf16.mxu0 0
    %2434 = vmatpush1.bf16.msra.mxu0 0
    %2435 = vmatprep.subr.bf16.mxu0 0
    %2436 = vmatpush1.bf16.msra.mxu0 0
    %2437 = vmatprep.subr.bf16.mxu0 0
    %2438 = vmatpush1.bf16.msra.mxu0 0
    %2439 = vmatprep.subr.bf16.mxu0 0
    %2440 = vmatpush1.bf16.msra.mxu0 0
    %2441 = vmatprep.subr.bf16.mxu0 0
    %2442 = vmatpush1.bf16.msra.mxu0 0
    %2443 = vmatprep.mubr.bf16.mxu0 0
    %2444 = vmatmul.mubr.bf16.gmra.mrb[0].mxu0 %v2409
    %v2445 = vpop.f32.mrb[0].mxu0
    %v2446 = vadd.f32 %v2328, %v2445
    %v2447 = vpop.f32.mrb[0].mxu0
    %v2448 = vpop.f32.mrb[0].mxu0
    %v2449 = vadd.f32 %v2328, %v2448
    %v2450 = vpop.f32.mrb[0].mxu0
    %2451 = vdwg.mxu0
    %v2452 = vmax.f32 %v2446, 0.0
    %v2453 = vmax.f32 %v2449, 0.0
    %v2454 = vld [vmem:[#allocation15] sm:$0x1]
    %v2456 = vlaneseq
    %v2457 = vshrl.u32 %v2456, 7
    %v2458 = vsub.s32 0, %v2457
    %v2459 = vrot.slane %v2454, %v2458
    %v2461 = vmul.f32 %v2452, %v2459
    %v2462 = vmul.f32 %v2453, %v2459
    %v2463 = vsel %vm1730, %v2461, 0.0
    %2464 = vadd.xlane.f32.xlu0 %v2463
    %v2465 = vpop.xlane.xlu0 %2464
    %v2466 = vsel %vm1730, %v2462, 0.0
    %2467 = vadd.xlane.f32.xlu0 %v2466
    %v2468 = vpop.xlane.xlu0 %2467
    %v2469 = vld [vmem:[#allocation2] sm:$0x1]
    %v2471 = vlaneseq
    %v2472 = vshrl.u32 %v2471, 7
    %v2473 = vsub.s32 0, %v2472
    %v2474 = vrot.slane %v2469, %v2473
    %v2476 = vadd.f32 %v2465, %v2474
    %v2477 = vadd.f32 %v2468, %v2474
    %vm2478 = vcmask 7168
    %2479 = vst.msk [vmem:[#allocation17] sm:$0xff] %vm2478, %v2476
    %2480 = vst.msk [vmem:[#allocation17 + $0x8] sm:$0xff] %vm2478, %v2477
    // Predicated region
    $region70: #{tpu_custom_call.1} parent=1 // pred_check
      _
    $region71: #{tpu_custom_call.1} parent=1 // pred_check_branch
      %2482 = sbr.rel (0) target = $region73
    $region72: #{tpu_custom_call.1} parent=1 // pred_region
      %s2484 = ssub.s32 256, 256
      %2485 = vsyncadd [#allocation5], %s2484
      %s2486 = sshll.u32 [#allocation17], 4
      %s2487 = int_to_ptr.vmem [resolvable:$true] %s2486
      %2492 = dma.vmem_to_hbm [thread:$0]  %s2487, 256, %s9, [#allocation5], 128, 128, 8
    $region73: #{tpu_custom_call.1} parent=1 // pred_fallthru
      _
    // Predicated region
    $region74: #{tpu_custom_call.1} parent=1 // pred_check
      _
    $region75: #{tpu_custom_call.1} parent=1 // pred_check_branch
      %2494 = sbr.rel (0) target = $region77
    $region76: #{tpu_custom_call.1} parent=1 // pred_region
      %2495 = dma.done [#allocation5], 256
    $region77: #{tpu_custom_call.1} parent=1 // pred_fallthru
      _
    %2496 = vsyncpa [#allocation4], 1
    %2497 = vsyncpa [#allocation7], 1
    %2498 = vsyncpa [#allocation10], 1
    %2499 = vsyncpa [#allocation13], 1
    %2500 = vsyncpa [#allocation16], 1
    %2501 = vsyncpa [#allocation5], 1

</llo_original>
